<compile_context>
chip_gen: v6e
topology: v6e:2x2x1
jax: 0.10.0
libtpu: 0.0.40
codegen_flags: <defaults>
</compile_context>

<pallas_src>
import jax
import jax.numpy as jnp
from jax.experimental import pallas as pl
from jax.experimental.pallas import tpu as pltpu

D_IN = 784        # 28*28 pixels
D_PAD = 896       # 7*128 lane-dense padding of the pixel dim
LAT = 10          # latent size
LAT_PAD = 128     # padded latent layout: [mu(10) | logvar(10) | zeros(108)]
X_W = D_PAD + LAT_PAD   # single streamed input: [x(784) | 0(112) | ones(10) | eps(10) | 0(108)]


def vae_kernel(x_ref,
               w1_ref, b1_ref, w2_ref, b2_ref, w3_ref, b3_ref,
               wd1_ref, bd1_ref, wd2_ref, bd2_ref, wd3_ref, bd3_ref,
               xhat_ref, kld_ref):
    # ---------------- single streamed input: pixels + reparam multiplier ----------------
    xin = x_ref[...]                                                       # (TM, 1024) bf16
    epsm = xin[:, D_PAD:].astype(jnp.float32)                              # (TM, 128): [1s | eps | 0]

    # ---------------- encoder (bf16 MXU operands, f32 accumulation / elementwise) --------
    # w1 rows for the eps lanes are zero, so contracting over the full 1024 lanes is exact.
    h1 = jnp.dot(xin, w1_ref[...], preferred_element_type=jnp.float32) + b1_ref[...]
    h1 = jnp.maximum(h1, 0.0).astype(jnp.bfloat16)                         # (TM, 256)
    h2 = jnp.dot(h1, w2_ref[...], preferred_element_type=jnp.float32) + b2_ref[...]
    h2 = jnp.maximum(h2, 0.0).astype(jnp.bfloat16)                         # (TM, 64)
    # fused latent heads: lanes [0:10)=mu, [10:20)=logvar, rest exactly 0
    z3 = jnp.dot(h2, w3_ref[...], preferred_element_type=jnp.float32) + b3_ref[...]
    z3 = jnp.maximum(z3, 0.0)                                              # (TM, 128) f32

    # ---------------- reparametrize in the padded-lane layout ----------------
    # epsm lanes [0:10)=1, [10:20)=eps, rest 0  ->  h_pad = [mu | logvar*eps | 0];
    # wd1 rows are duplicated over those lane groups, so h_pad @ wd1_dup == (mu + logvar*eps) @ wd1.
    h_pad = (z3 * epsm).astype(jnp.bfloat16)                               # (TM, 128)

    # ---------------- decoder ----------------
    d1 = jnp.dot(h_pad, wd1_ref[...], preferred_element_type=jnp.float32) + bd1_ref[...]
    d1 = jnp.maximum(d1, 0.0).astype(jnp.bfloat16)                         # (TM, 64)
    d2 = jnp.dot(d1, wd2_ref[...], preferred_element_type=jnp.float32) + bd2_ref[...]
    d2 = jnp.maximum(d2, 0.0).astype(jnp.bfloat16)                         # (TM, 256)
    logits = jnp.dot(d2, wd3_ref[...], preferred_element_type=jnp.float32) + bd3_ref[...]
    # sigmoid in f32 (v5e has no bf16 VPU/EUP), cast only at the store -> bf16 writeback
    xhat_ref[...] = jax.nn.sigmoid(logits).astype(jnp.bfloat16)            # (TM, 896) bf16

    # ---------------- in-kernel KLD partial reduction ----------------
    # per-lane terms: mu^2 on mu lanes, logvar^2 - log(1e-8+logvar^2) - 1 on logvar lanes, 0 elsewhere
    z3sq = z3 * z3
    lane = jax.lax.broadcasted_iota(jnp.int32, z3.shape, 1)
    lv_mask = (lane >= LAT) & (lane < 2 * LAT)
    terms = z3sq + jnp.where(lv_mask, -jnp.log(1e-8 + z3sq) - 1.0, 0.0)    # (TM, 128)
    # pad rows inside the tile produce garbage from the bias chain -> mask via the "ones" lane
    row_mask = epsm[:, 0:1]                                                # 1 for real rows, 0 for pad
    terms = terms * row_mask
    tm = terms.shape[0]
    # sum the sublane-tile groups -> one (8,128) partial per grid step (XLU/VPU work, DMA-free)
    kld_ref[...] = jnp.sum(terms.reshape(tm // 8, 8, LAT_PAD), axis=0)     # (8, 128) f32


def init_params(key):
    """Deterministic synthetic params as (in, out) matrices and (1, out) biases."""
    dims = [
        ("fc1", 784, 256), ("fc2", 256, 64), ("fc31", 64, 10), ("fc32", 64, 10),
        ("dec1", 10, 64), ("dec2", 64, 256), ("dec3", 256, 784),
    ]
    params = []
    for i, (_, din, dout) in enumerate(dims):
        kw, kb = jax.random.split(jax.random.fold_in(key, i))
        scale = 1.0 / jnp.sqrt(jnp.float32(din))
        w = jax.random.uniform(kw, (din, dout), jnp.float32, -scale, scale)
        b = jax.random.uniform(kb, (1, dout), jnp.float32, -scale, scale)
        params += [w, b]
    return params


def pack_params(params):
    """Pad / fuse / cast params into the kernel's lane-dense bf16 layout."""
    (w1, b1, w2, b2, w31, b31, w32, b32, wd1, bd1, wd2, bd2, wd3, bd3) = params
    bf16, f32 = jnp.bfloat16, jnp.float32
    # fc1 weight widened to the full streamed-input width; eps lanes contract against zeros.
    w1p = jnp.zeros((X_W, 256), bf16).at[:D_IN, :].set(w1.astype(bf16))
    w3p = jnp.zeros((64, LAT_PAD), bf16)
    w3p = w3p.at[:, :LAT].set(w31.astype(bf16)).at[:, LAT:2 * LAT].set(w32.astype(bf16))
    b3p = jnp.zeros((1, LAT_PAD), f32)
    b3p = b3p.at[:, :LAT].set(b31.astype(f32)).at[:, LAT:2 * LAT].set(b32.astype(f32))
    wd1p = jnp.zeros((LAT_PAD, 64), bf16)
    wd1p = wd1p.at[:LAT, :].set(wd1.astype(bf16)).at[LAT:2 * LAT, :].set(wd1.astype(bf16))
    wd3p = jnp.zeros((256, D_PAD), bf16).at[:, :D_IN].set(wd3.astype(bf16))
    bd3p = jnp.zeros((1, D_PAD), f32).at[:, :D_IN].set(bd3.astype(f32))
    return [w1p, b1.astype(f32), w2.astype(bf16), b2.astype(f32),
            w3p, b3p, wd1p, bd1.astype(f32),
            wd2.astype(bf16), bd2.astype(f32), wd3p, bd3p]


def _round_up(n, m):
    return (n + m - 1) // m * m


def _choose_tm(batch, tm_max):
    tm_full = _round_up(max(batch, 1), 8)
    if tm_full <= tm_max:
        return tm_full
    # large batch: keep >= 2 grid steps so both v7x TensorCores get work on the parallel axis
    return max(8, min(tm_max, _round_up((batch + 1) // 2, 8)))


def vae_forward(x_nchw, eps, packed, tm_max=512):
    """Forward pass: returns (x_hat (B,1,28,28) f32, kld scalar f32).

    tm_max=512 is safe under v5e's default scoped-VMEM; on v6e/v7x it can be raised to
    1024 together with vmem_limit_bytes for slightly better per-step-overhead amortization.
    """
    B = x_nchw.shape[0]
    TM = _choose_tm(B, tm_max)
    B_pad = _round_up(B, TM)
    n_tiles = B_pad // TM

    # Single streamed bf16 input: [x(784) | 0 | ones(10) | eps(10) | 0].
    # TODO(synk): for a fused training step, accept x pre-packed in this layout (and fuse the
    # BCE loss in-kernel) to drop the wrapper pad/cast and the x_hat writeback entirely.
    x_flat = x_nchw.reshape(B, D_IN)
    x_in = jnp.zeros((B_pad, X_W), jnp.bfloat16)
    x_in = x_in.at[:B, :D_IN].set(x_flat.astype(jnp.bfloat16))
    x_in = x_in.at[:B, D_PAD:D_PAD + LAT].set(jnp.ones((B, LAT), jnp.bfloat16))
    x_in = x_in.at[:B, D_PAD + LAT:D_PAD + 2 * LAT].set(eps.astype(jnp.bfloat16))

    def row_spec(ncols):
        return pl.BlockSpec((TM, ncols), lambda i: (i, 0))

    def resident_spec(shape):
        # constant block index -> weight stays resident in VMEM across grid steps
        return pl.BlockSpec(shape, lambda i: (0, 0))

    in_specs = [row_spec(X_W)] + [resident_spec(p.shape) for p in packed]

    xhat_pad, kld_part = pl.pallas_call(
        vae_kernel,
        grid=(n_tiles,),
        in_specs=in_specs,
        out_specs=(row_spec(D_PAD),
                   pl.BlockSpec((8, LAT_PAD), lambda i: (i, 0))),
        out_shape=(jax.ShapeDtypeStruct((B_pad, D_PAD), jnp.bfloat16),
                   jax.ShapeDtypeStruct((n_tiles * 8, LAT_PAD), jnp.float32)),
        compiler_params=pltpu.CompilerParams(
            dimension_semantics=("parallel",),
            vmem_limit_bytes=48 << 20),
    )(x_in, *packed)

    x_hat = xhat_pad[:B, :D_IN].astype(jnp.float32).reshape(B, 1, 28, 28)
    kld = 0.5 * jnp.sum(kld_part) / (B * 28 * 28)
    return x_hat, kld


def vae_forward_ref_f32(x_nchw, eps, params):
    """Exact f32 module semantics (PyTorch VAE_new.forward)."""
    (w1, b1, w2, b2, w31, b31, w32, b32, wd1, bd1, wd2, bd2, wd3, bd3) = params
    B = x_nchw.shape[0]
    x = x_nchw.reshape(B, D_IN).astype(jnp.float32)
    h1 = jnp.maximum(x @ w1 + b1, 0.0)
    h2 = jnp.maximum(h1 @ w2 + b2, 0.0)
    mu = jnp.maximum(h2 @ w31 + b31, 0.0)
    logvar = jnp.maximum(h2 @ w32 + b32, 0.0)
    h = mu + logvar * eps
    d1 = jnp.maximum(h @ wd1 + bd1, 0.0)
    d2 = jnp.maximum(d1 @ wd2 + bd2, 0.0)
    x_hat = jax.nn.sigmoid(d2 @ wd3 + bd3).reshape(B, 1, 28, 28)
    lv2 = logvar ** 2
    kld = 0.5 * jnp.sum(mu ** 2 + lv2 - jnp.log(1e-8 + lv2) - 1.0) / (B * 28 * 28)
    return x_hat, kld


def vae_forward_ref_bf16(x_nchw, eps, params):
    """Reference mimicking the kernel's bf16 MXU operands, bf16 eps stream, bf16 x_hat store."""
    (w1, b1, w2, b2, w31, b31, w32, b32, wd1, bd1, wd2, bd2, wd3, bd3) = params
    bf16, f32 = jnp.bfloat16, jnp.float32

    def mm(a, w):
        return jnp.dot(a.astype(bf16), w.astype(bf16), preferred_element_type=f32)

    B = x_nchw.shape[0]
    x = x_nchw.reshape(B, D_IN)
    h1 = jnp.maximum(mm(x, w1) + b1, 0.0)
    h2 = jnp.maximum(mm(h1, w2) + b2, 0.0)
    mu = jnp.maximum(mm(h2, w31) + b31, 0.0)
    logvar = jnp.maximum(mm(h2, w32) + b32, 0.0)
    eps_b = eps.astype(bf16).astype(f32)                    # kernel streams eps as bf16
    # kernel feeds mu and logvar*eps as separate bf16 lane groups into dec1
    d1 = jnp.maximum(mm(mu, wd1) + mm(logvar * eps_b, wd1) + bd1, 0.0)
    d2 = jnp.maximum(mm(d1, wd2) + bd2, 0.0)
    x_hat = jax.nn.sigmoid(mm(d2, wd3) + bd3)
    x_hat = x_hat.astype(bf16).astype(f32).reshape(B, 1, 28, 28)   # kernel stores bf16
    lv2 = logvar ** 2
    kld = 0.5 * jnp.sum(mu ** 2 + lv2 - jnp.log(1e-8 + lv2) - 1.0) / (B * 28 * 28)
    return x_hat, kld


if __name__ == "__main__":
    key = jax.random.PRNGKey(0)
    k_x, k_eps, k_p = jax.random.split(key, 3)

    B = 2
    x = jax.random.uniform(k_x, (B, 1, 28, 28), jnp.float32)      # MNIST-like input
    eps = jax.random.normal(k_eps, (B, LAT), jnp.float32)          # reparam noise (torch.randn_like)
    params = init_params(k_p)
    packed = pack_params(params)

    x_hat, kld = vae_forward(x, eps, packed)
    jax.block_until_ready((x_hat, kld))
    assert x_hat.shape == (B, 1, 28, 28)
    assert kld.shape == ()

    # tight check vs a reference that mimics the kernel's bf16 operands / bf16 output store
    x_hat_m, kld_m = vae_forward_ref_bf16(x, eps, params)
    assert jnp.allclose(x_hat, x_hat_m, atol=1e-2, rtol=0), "x_hat mismatch vs bf16 ref"
    assert jnp.allclose(kld, kld_m, atol=2e-3, rtol=2e-3), "kld mismatch vs bf16 ref"

    # loose sanity check vs exact f32 module semantics (bf16 quantization only)
    x_hat_f, kld_f = vae_forward_ref_f32(x, eps, params)
    assert float(jnp.max(jnp.abs(x_hat - x_hat_f))) < 0.05
    assert float(jnp.abs(kld - kld_f)) < 0.05 * max(1.0, float(jnp.abs(kld_f)))

    print("KERNEL_OK")
</pallas_src>

<mosaic_0001>
module attributes {stable_mosaic.version = 11 : i64} {
  func.func @vae_kernel(%arg0: i32, %arg1: memref<8x1024xbf16, #tpu.memory_space<vmem>>, %arg2: memref<1024x256xbf16, #tpu.memory_space<vmem>>, %arg3: memref<1x256xf32, #tpu.memory_space<vmem>>, %arg4: memref<256x64xbf16, #tpu.memory_space<vmem>>, %arg5: memref<1x64xf32, #tpu.memory_space<vmem>>, %arg6: memref<64x128xbf16, #tpu.memory_space<vmem>>, %arg7: memref<1x128xf32, #tpu.memory_space<vmem>>, %arg8: memref<128x64xbf16, #tpu.memory_space<vmem>>, %arg9: memref<1x64xf32, #tpu.memory_space<vmem>>, %arg10: memref<64x256xbf16, #tpu.memory_space<vmem>>, %arg11: memref<1x256xf32, #tpu.memory_space<vmem>>, %arg12: memref<256x896xbf16, #tpu.memory_space<vmem>>, %arg13: memref<1x896xf32, #tpu.memory_space<vmem>>, %arg14: memref<8x896xbf16, #tpu.memory_space<vmem>>, %arg15: memref<8x128xf32, #tpu.memory_space<vmem>>) attributes {dimension_semantics = [#tpu.dimension_semantics<parallel>], iteration_bounds = array<i64: 1>, scalar_prefetch = 0 : i64, scratch_operands = 0 : i64, tpu.core_type = #tpu.core_type<tc>, window_params = [{transform_indices = @transform_0, window_bounds = array<i64: 8, 1024>}, {pipeline_mode = #tpu.pipeline_mode<synchronous>, transform_indices = @transform_1, window_bounds = array<i64: 1024, 256>}, {pipeline_mode = #tpu.pipeline_mode<synchronous>, transform_indices = @transform_2, window_bounds = array<i64: 1, 256>}, {pipeline_mode = #tpu.pipeline_mode<synchronous>, transform_indices = @transform_3, window_bounds = array<i64: 256, 64>}, {pipeline_mode = #tpu.pipeline_mode<synchronous>, transform_indices = @transform_4, window_bounds = array<i64: 1, 64>}, {pipeline_mode = #tpu.pipeline_mode<synchronous>, transform_indices = @transform_5, window_bounds = array<i64: 64, 128>}, {pipeline_mode = #tpu.pipeline_mode<synchronous>, transform_indices = @transform_6, window_bounds = array<i64: 1, 128>}, {pipeline_mode = #tpu.pipeline_mode<synchronous>, transform_indices = @transform_7, window_bounds = array<i64: 128, 64>}, {pipeline_mode = #tpu.pipeline_mode<synchronous>, transform_indices = @transform_8, window_bounds = array<i64: 1, 64>}, {pipeline_mode = #tpu.pipeline_mode<synchronous>, transform_indices = @transform_9, window_bounds = array<i64: 64, 256>}, {pipeline_mode = #tpu.pipeline_mode<synchronous>, transform_indices = @transform_10, window_bounds = array<i64: 1, 256>}, {pipeline_mode = #tpu.pipeline_mode<synchronous>, transform_indices = @transform_11, window_bounds = array<i64: 256, 896>}, {pipeline_mode = #tpu.pipeline_mode<synchronous>, transform_indices = @transform_12, window_bounds = array<i64: 1, 896>}, {transform_indices = @transform_13, window_bounds = array<i64: 8, 896>}, {transform_indices = @transform_14, window_bounds = array<i64: 8, 128>}]} {
    %c0 = arith.constant 0 : index
    %c0_0 = arith.constant 0 : index
    %0 = vector.load %arg1[%c0, %c0_0] : memref<8x1024xbf16, #tpu.memory_space<vmem>>, vector<8x1024xbf16>
    %1 = vector.extract_strided_slice %0 {offsets = [0, 896], sizes = [8, 128], strides = [1, 1]} : vector<8x1024xbf16> to vector<8x128xbf16>
    %2 = arith.extf %1 : vector<8x128xbf16> to vector<8x128xf32>
    %c0_1 = arith.constant 0 : index
    %c0_2 = arith.constant 0 : index
    %3 = vector.load %arg2[%c0_1, %c0_2] : memref<1024x256xbf16, #tpu.memory_space<vmem>>, vector<1024x256xbf16>
    %cst = arith.constant dense<0.000000e+00> : vector<8x256xf32>
    %4 = tpu.matmul %0, %3, %cst {dimension_numbers = #tpu.dot_dimension_numbers<[1], [0], [0], [1], [0, 0, 1, 1], [], []>} : vector<8x1024xbf16>, vector<1024x256xbf16>, vector<8x256xf32> -> vector<8x256xf32>
    %c0_3 = arith.constant 0 : index
    %c0_4 = arith.constant 0 : index
    %5 = vector.load %arg3[%c0_3, %c0_4] : memref<1x256xf32, #tpu.memory_space<vmem>>, vector<1x256xf32>
    %6 = vector.broadcast %5 : vector<1x256xf32> to vector<8x256xf32>
    %7 = arith.addf %4, %6 : vector<8x256xf32>
    %cst_5 = arith.constant 0.000000e+00 : f32
    %8 = vector.broadcast %cst_5 : f32 to vector<8x256xf32>
    %9 = arith.maximumf %7, %8 : vector<8x256xf32>
    %10 = arith.truncf %9 : vector<8x256xf32> to vector<8x256xbf16>
    %c0_6 = arith.constant 0 : index
    %c0_7 = arith.constant 0 : index
    %11 = vector.load %arg4[%c0_6, %c0_7] : memref<256x64xbf16, #tpu.memory_space<vmem>>, vector<256x64xbf16>
    %cst_8 = arith.constant dense<0.000000e+00> : vector<8x64xf32>
    %12 = tpu.matmul %10, %11, %cst_8 {dimension_numbers = #tpu.dot_dimension_numbers<[1], [0], [0], [1], [0, 0, 1, 1], [], []>} : vector<8x256xbf16>, vector<256x64xbf16>, vector<8x64xf32> -> vector<8x64xf32>
    %c0_9 = arith.constant 0 : index
    %c0_10 = arith.constant 0 : index
    %13 = vector.load %arg5[%c0_9, %c0_10] : memref<1x64xf32, #tpu.memory_space<vmem>>, vector<1x64xf32>
    %14 = vector.broadcast %13 : vector<1x64xf32> to vector<8x64xf32>
    %15 = arith.addf %12, %14 : vector<8x64xf32>
    %cst_11 = arith.constant 0.000000e+00 : f32
    %16 = vector.broadcast %cst_11 : f32 to vector<8x64xf32>
    %17 = arith.maximumf %15, %16 : vector<8x64xf32>
    %18 = arith.truncf %17 : vector<8x64xf32> to vector<8x64xbf16>
    %c0_12 = arith.constant 0 : index
    %c0_13 = arith.constant 0 : index
    %19 = vector.load %arg6[%c0_12, %c0_13] : memref<64x128xbf16, #tpu.memory_space<vmem>>, vector<64x128xbf16>
    %cst_14 = arith.constant dense<0.000000e+00> : vector<8x128xf32>
    %20 = tpu.matmul %18, %19, %cst_14 {dimension_numbers = #tpu.dot_dimension_numbers<[1], [0], [0], [1], [0, 0, 1, 1], [], []>} : vector<8x64xbf16>, vector<64x128xbf16>, vector<8x128xf32> -> vector<8x128xf32>
    %c0_15 = arith.constant 0 : index
    %c0_16 = arith.constant 0 : index
    %21 = vector.load %arg7[%c0_15, %c0_16] : memref<1x128xf32, #tpu.memory_space<vmem>>, vector<1x128xf32>
    %22 = vector.broadcast %21 : vector<1x128xf32> to vector<8x128xf32>
    %23 = arith.addf %20, %22 : vector<8x128xf32>
    %cst_17 = arith.constant 0.000000e+00 : f32
    %24 = vector.broadcast %cst_17 : f32 to vector<8x128xf32>
    %25 = arith.maximumf %23, %24 : vector<8x128xf32>
    %26 = arith.mulf %25, %2 : vector<8x128xf32>
    %27 = arith.truncf %26 : vector<8x128xf32> to vector<8x128xbf16>
    %c0_18 = arith.constant 0 : index
    %c0_19 = arith.constant 0 : index
    %28 = vector.load %arg8[%c0_18, %c0_19] : memref<128x64xbf16, #tpu.memory_space<vmem>>, vector<128x64xbf16>
    %cst_20 = arith.constant dense<0.000000e+00> : vector<8x64xf32>
    %29 = tpu.matmul %27, %28, %cst_20 {dimension_numbers = #tpu.dot_dimension_numbers<[1], [0], [0], [1], [0, 0, 1, 1], [], []>} : vector<8x128xbf16>, vector<128x64xbf16>, vector<8x64xf32> -> vector<8x64xf32>
    %c0_21 = arith.constant 0 : index
    %c0_22 = arith.constant 0 : index
    %30 = vector.load %arg9[%c0_21, %c0_22] : memref<1x64xf32, #tpu.memory_space<vmem>>, vector<1x64xf32>
    %31 = vector.broadcast %30 : vector<1x64xf32> to vector<8x64xf32>
    %32 = arith.addf %29, %31 : vector<8x64xf32>
    %cst_23 = arith.constant 0.000000e+00 : f32
    %33 = vector.broadcast %cst_23 : f32 to vector<8x64xf32>
    %34 = arith.maximumf %32, %33 : vector<8x64xf32>
    %35 = arith.truncf %34 : vector<8x64xf32> to vector<8x64xbf16>
    %c0_24 = arith.constant 0 : index
    %c0_25 = arith.constant 0 : index
    %36 = vector.load %arg10[%c0_24, %c0_25] : memref<64x256xbf16, #tpu.memory_space<vmem>>, vector<64x256xbf16>
    %cst_26 = arith.constant dense<0.000000e+00> : vector<8x256xf32>
    %37 = tpu.matmul %35, %36, %cst_26 {dimension_numbers = #tpu.dot_dimension_numbers<[1], [0], [0], [1], [0, 0, 1, 1], [], []>} : vector<8x64xbf16>, vector<64x256xbf16>, vector<8x256xf32> -> vector<8x256xf32>
    %c0_27 = arith.constant 0 : index
    %c0_28 = arith.constant 0 : index
    %38 = vector.load %arg11[%c0_27, %c0_28] : memref<1x256xf32, #tpu.memory_space<vmem>>, vector<1x256xf32>
    %39 = vector.broadcast %38 : vector<1x256xf32> to vector<8x256xf32>
    %40 = arith.addf %37, %39 : vector<8x256xf32>
    %cst_29 = arith.constant 0.000000e+00 : f32
    %41 = vector.broadcast %cst_29 : f32 to vector<8x256xf32>
    %42 = arith.maximumf %40, %41 : vector<8x256xf32>
    %43 = arith.truncf %42 : vector<8x256xf32> to vector<8x256xbf16>
    %c0_30 = arith.constant 0 : index
    %c0_31 = arith.constant 0 : index
    %44 = vector.load %arg12[%c0_30, %c0_31] : memref<256x896xbf16, #tpu.memory_space<vmem>>, vector<256x896xbf16>
    %cst_32 = arith.constant dense<0.000000e+00> : vector<8x896xf32>
    %45 = tpu.matmul %43, %44, %cst_32 {dimension_numbers = #tpu.dot_dimension_numbers<[1], [0], [0], [1], [0, 0, 1, 1], [], []>} : vector<8x256xbf16>, vector<256x896xbf16>, vector<8x896xf32> -> vector<8x896xf32>
    %c0_33 = arith.constant 0 : index
    %c0_34 = arith.constant 0 : index
    %46 = vector.load %arg13[%c0_33, %c0_34] : memref<1x896xf32, #tpu.memory_space<vmem>>, vector<1x896xf32>
    %47 = vector.broadcast %46 : vector<1x896xf32> to vector<8x896xf32>
    %48 = arith.addf %45, %47 : vector<8x896xf32>
    %49 = arith.negf %48 : vector<8x896xf32>
    %50 = math.exp %49 : vector<8x896xf32>
    %cst_35 = arith.constant 1.000000e+00 : f32
    %51 = vector.broadcast %cst_35 : f32 to vector<8x896xf32>
    %52 = arith.addf %51, %50 : vector<8x896xf32>
    %53 = arith.divf %51, %52 : vector<8x896xf32>
    %54 = arith.truncf %53 : vector<8x896xf32> to vector<8x896xbf16>
    %c0_36 = arith.constant 0 : index
    %c0_37 = arith.constant 0 : index
    %55 = vector.load %arg14[%c0_36, %c0_37] : memref<8x896xbf16, #tpu.memory_space<vmem>>, vector<8x896xbf16>
    tpu.vector_store %arg14[%c0_36, %c0_37], %54 {strides = array<i32>} : memref<8x896xbf16, #tpu.memory_space<vmem>>, vector<8x896xbf16>,
    %56 = arith.mulf %25, %25 : vector<8x128xf32>
    %57 = tpu.iota {dimensions = array<i32: 1>} : vector<8x128xi32>
    %c10_i32 = arith.constant 10 : i32
    %58 = vector.broadcast %c10_i32 : i32 to vector<8x128xi32>
    %59 = arith.cmpi sge, %57, %58 : vector<8x128xi32>
    %c20_i32 = arith.constant 20 : i32
    %60 = vector.broadcast %c20_i32 : i32 to vector<8x128xi32>
    %61 = arith.cmpi slt, %57, %60 : vector<8x128xi32>
    %62 = arith.andi %59, %61 : vector<8x128xi1>
    %cst_38 = arith.constant 9.99999993E-9 : f32
    %63 = vector.broadcast %cst_38 : f32 to vector<8x128xf32>
    %64 = arith.addf %63, %56 : vector<8x128xf32>
    %65 = math.log %64 : vector<8x128xf32>
    %cst_39 = arith.constant 0.000000e+00 : f32
    %66 = vector.broadcast %cst_39 : f32 to vector<8x128xf32>
    %67 = arith.subf %66, %65 : vector<8x128xf32>
    %cst_40 = arith.constant 1.000000e+00 : f32
    %68 = vector.broadcast %cst_40 : f32 to vector<8x128xf32>
    %69 = arith.subf %67, %68 : vector<8x128xf32>
    %cst_41 = arith.constant 0.000000e+00 : f32
    %70 = vector.broadcast %cst_41 : f32 to vector<8x128xf32>
    %71 = arith.select %62, %69, %70 : vector<8x128xi1>, vector<8x128xf32>
    %72 = arith.addf %56, %71 : vector<8x128xf32>
    %73 = vector.extract_strided_slice %2 {offsets = [0, 0], sizes = [8, 1], strides = [1, 1]} : vector<8x128xf32> to vector<8x1xf32>
    %74 = vector.broadcast %73 : vector<8x1xf32> to vector<8x128xf32>
    %75 = arith.mulf %72, %74 : vector<8x128xf32>
    %76 = vector.shape_cast %75 : vector<8x128xf32> to vector<1x8x128xf32>
    %cst_42 = arith.constant dense<0.000000e+00> : vector<8x128xf32>
    %77 = vector.multi_reduction <add>, %76, %cst_42 [0] : vector<1x8x128xf32> to vector<8x128xf32>
    %c0_43 = arith.constant 0 : index
    %c0_44 = arith.constant 0 : index
    %78 = vector.load %arg15[%c0_43, %c0_44] : memref<8x128xf32, #tpu.memory_space<vmem>>, vector<8x128xf32>
    tpu.vector_store %arg15[%c0_43, %c0_44], %77 {strides = array<i32>} : memref<8x128xf32, #tpu.memory_space<vmem>>, vector<8x128xf32>,
    return
  }
  func.func @transform_0(%arg0: i32) -> (i32, i32) {
    %c0_i32 = arith.constant 0 : i32
    %c0_i32_0 = arith.constant 0 : i32
    return %arg0, %c0_i32 : i32, i32
  }
  func.func @transform_1(%arg0: i32) -> (i32, i32) {
    %c0_i32 = arith.constant 0 : i32
    %c0_i32_0 = arith.constant 0 : i32
    %c0_i32_1 = arith.constant 0 : i32
    return %c0_i32, %c0_i32_0 : i32, i32
  }
  func.func @transform_2(%arg0: i32) -> (i32, i32) {
    %c0_i32 = arith.constant 0 : i32
    %c0_i32_0 = arith.constant 0 : i32
    %c0_i32_1 = arith.constant 0 : i32
    return %c0_i32, %c0_i32_0 : i32, i32
  }
  func.func @transform_3(%arg0: i32) -> (i32, i32) {
    %c0_i32 = arith.constant 0 : i32
    %c0_i32_0 = arith.constant 0 : i32
    %c0_i32_1 = arith.constant 0 : i32
    return %c0_i32, %c0_i32_0 : i32, i32
  }
  func.func @transform_4(%arg0: i32) -> (i32, i32) {
    %c0_i32 = arith.constant 0 : i32
    %c0_i32_0 = arith.constant 0 : i32
    %c0_i32_1 = arith.constant 0 : i32
    return %c0_i32, %c0_i32_0 : i32, i32
  }
  func.func @transform_5(%arg0: i32) -> (i32, i32) {
    %c0_i32 = arith.constant 0 : i32
    %c0_i32_0 = arith.constant 0 : i32
    %c0_i32_1 = arith.constant 0 : i32
    return %c0_i32, %c0_i32_0 : i32, i32
  }
  func.func @transform_6(%arg0: i32) -> (i32, i32) {
    %c0_i32 = arith.constant 0 : i32
    %c0_i32_0 = arith.constant 0 : i32
    %c0_i32_1 = arith.constant 0 : i32
    return %c0_i32, %c0_i32_0 : i32, i32
  }
  func.func @transform_7(%arg0: i32) -> (i32, i32) {
    %c0_i32 = arith.constant 0 : i32
    %c0_i32_0 = arith.constant 0 : i32
    %c0_i32_1 = arith.constant 0 : i32
    return %c0_i32, %c0_i32_0 : i32, i32
  }
  func.func @transform_8(%arg0: i32) -> (i32, i32) {
    %c0_i32 = arith.constant 0 : i32
    %c0_i32_0 = arith.constant 0 : i32
    %c0_i32_1 = arith.constant 0 : i32
    return %c0_i32, %c0_i32_0 : i32, i32
  }
  func.func @transform_9(%arg0: i32) -> (i32, i32) {
    %c0_i32 = arith.constant 0 : i32
    %c0_i32_0 = arith.constant 0 : i32
    %c0_i32_1 = arith.constant 0 : i32
    return %c0_i32, %c0_i32_0 : i32, i32
  }
  func.func @transform_10(%arg0: i32) -> (i32, i32) {
    %c0_i32 = arith.constant 0 : i32
    %c0_i32_0 = arith.constant 0 : i32
    %c0_i32_1 = arith.constant 0 : i32
    return %c0_i32, %c0_i32_0 : i32, i32
  }
  func.func @transform_11(%arg0: i32) -> (i32, i32) {
    %c0_i32 = arith.constant 0 : i32
    %c0_i32_0 = arith.constant 0 : i32
    %c0_i32_1 = arith.constant 0 : i32
    return %c0_i32, %c0_i32_0 : i32, i32
  }
  func.func @transform_12(%arg0: i32) -> (i32, i32) {
    %c0_i32 = arith.constant 0 : i32
    %c0_i32_0 = arith.constant 0 : i32
    %c0_i32_1 = arith.constant 0 : i32
    return %c0_i32, %c0_i32_0 : i32, i32
  }
  func.func @transform_13(%arg0: i32) -> (i32, i32) {
    %c0_i32 = arith.constant 0 : i32
    %c0_i32_0 = arith.constant 0 : i32
    return %arg0, %c0_i32 : i32, i32
  }
  func.func @transform_14(%arg0: i32) -> (i32, i32) {
    %c0_i32 = arith.constant 0 : i32
    %c0_i32_0 = arith.constant 0 : i32
    return %arg0, %c0_i32 : i32, i32
  }
}

</mosaic_0001>

<llo_original>
// kernel: tpu_custom_call.1
$region0: #{tpu_custom_call.1}
  #allocation0 [shape = 'u32[]', space=smem, size = 0x4, offset = 0x4, fixed_abs, tag = 'smem constant byte address 0x4 - core index']
  #allocation1 [shape = 'u32[144,128]{1,0:T(1,128)}', space=vmem, size = 0x12000, scoped, tag = 'internal scratch']
  %s0 = inlined_call_operand.vmem [shape: bf16[8,1024], index: 0, kind: input, shape index: {}]
  %s1 = inlined_call_operand.hbm [shape: bf16[1024,256], index: 1, kind: input, shape index: {}]
  %s2 = inlined_call_operand.vmem [shape: f32[1,256], index: 2, kind: input, shape index: {}]
  %s3 = inlined_call_operand.vmem [shape: bf16[256,64], index: 3, kind: input, shape index: {}]
  %s4 = inlined_call_operand.vmem [shape: f32[1,64], index: 4, kind: input, shape index: {}]
  %s5 = inlined_call_operand.vmem [shape: bf16[64,128], index: 5, kind: input, shape index: {}]
  %s6 = inlined_call_operand.vmem [shape: f32[1,128], index: 6, kind: input, shape index: {}]
  %s7 = inlined_call_operand.vmem [shape: bf16[128,64], index: 7, kind: input, shape index: {}]
  %s8 = inlined_call_operand.vmem [shape: f32[1,64], index: 8, kind: input, shape index: {}]
  %s9 = inlined_call_operand.vmem [shape: bf16[64,256], index: 9, kind: input, shape index: {}]
  %s10 = inlined_call_operand.vmem [shape: f32[1,256], index: 10, kind: input, shape index: {}]
  %s11 = inlined_call_operand.hbm [shape: bf16[256,896], index: 11, kind: input, shape index: {}]
  %s12 = inlined_call_operand.vmem [shape: f32[1,896], index: 12, kind: input, shape index: {}]
  %s13 = inlined_call_operand.hbm [shape: bf16[8,896], index: 13, kind: output, shape index: {0}]
  %s14 = inlined_call_operand.hbm [shape: f32[8,128], index: 14, kind: output, shape index: {1}]
  %15 = xla_tuple %s13, %s14
  %s16 = sld [smem:[#allocation0]]
  $region78: #{tpu_custom_call.1} parent=0
    _
  %s18 = ssub.s32 1, %s16
  %s19 = scalar_select 0, %s18, %s16
  $region1: #{tpu_custom_call.1} parent=0
    #allocation2 [shape = 'u8[524288]{0}', space=vmem, size = 0x80000, scoped, tag = 'input window, operand 1, single buffered']
    #allocation3 [shape = 's32[1]{0}', space=sflag, size = 0x4, scoped, tag = 'scoped memory for tpu_custom_call.1']
    #allocation4 [shape = 's32[1]{0}', space=sflag, size = 0x4, scoped, tag = 'scoped memory for tpu_custom_call.1']
    #allocation5 [shape = 'u8[458752]{0}', space=vmem, size = 0x70000, scoped, tag = 'input window, operand 11, single buffered']
    #allocation6 [shape = 's32[1]{0}', space=sflag, size = 0x4, scoped, tag = 'scoped memory for tpu_custom_call.1']
    #allocation7 [shape = 'u8[14336]{0}', space=vmem, size = 0x3800, scoped, tag = 'output window, operand 0, single buffered']
    #allocation8 [shape = 'u8[4096]{0}', space=vmem, size = 0x1000, scoped, tag = 'output window, operand 1, single buffered']
    #allocation9 [shape = 's32[1]{0}', space=sflag, size = 0x4, scoped, tag = 'scoped memory for tpu_custom_call.1']
    %20 = vsyncpa [#allocation3], 0
    %21 = vsyncpa [#allocation6], 0
    %22 = vsyncpa [#allocation4], 0
    %23 = vsyncpa [#allocation9], 0
    // Predicated region
    $region2: #{tpu_custom_call.1} parent=1 // pred_check
      _
    $region3: #{tpu_custom_call.1} parent=1 // pred_check_branch
      %25 = sbr.rel (0) target = $region5
    $region4: #{tpu_custom_call.1} parent=1 // pred_region
      _
    $region5: #{tpu_custom_call.1} parent=1 // pred_fallthru
      _
    // Predicated region
    $region6: #{tpu_custom_call.1} parent=1 // pred_check
      _
    $region7: #{tpu_custom_call.1} parent=1 // pred_check_branch
      %27 = sbr.rel (0) target = $region9
    $region8: #{tpu_custom_call.1} parent=1 // pred_region
      %s29 = ssub.s32 16384, 16384
      %30 = vsyncadd [#allocation3], %s29
      %s31 = sshll.u32 [#allocation2], 4
      %s32 = int_to_ptr.vmem [resolvable:$true] %s31
      %37 = dma.hbm_to_vmem [thread:$0]  %s1, 16384, %s32, [#allocation3], 128, 128, 8
    $region9: #{tpu_custom_call.1} parent=1 // pred_fallthru
      _
    // Predicated region
    $region10: #{tpu_custom_call.1} parent=1 // pred_check
      _
    $region11: #{tpu_custom_call.1} parent=1 // pred_check_branch
      %39 = sbr.rel (0) target = $region13
    $region12: #{tpu_custom_call.1} parent=1 // pred_region
      _
    $region13: #{tpu_custom_call.1} parent=1 // pred_fallthru
      _
    // Predicated region
    $region14: #{tpu_custom_call.1} parent=1 // pred_check
      _
    $region15: #{tpu_custom_call.1} parent=1 // pred_check_branch
      %41 = sbr.rel (0) target = $region17
    $region16: #{tpu_custom_call.1} parent=1 // pred_region
      _
    $region17: #{tpu_custom_call.1} parent=1 // pred_fallthru
      _
    // Predicated region
    $region18: #{tpu_custom_call.1} parent=1 // pred_check
      _
    $region19: #{tpu_custom_call.1} parent=1 // pred_check_branch
      %43 = sbr.rel (0) target = $region21
    $region20: #{tpu_custom_call.1} parent=1 // pred_region
      _
    $region21: #{tpu_custom_call.1} parent=1 // pred_fallthru
      _
    // Predicated region
    $region22: #{tpu_custom_call.1} parent=1 // pred_check
      _
    $region23: #{tpu_custom_call.1} parent=1 // pred_check_branch
      %45 = sbr.rel (0) target = $region25
    $region24: #{tpu_custom_call.1} parent=1 // pred_region
      _
    $region25: #{tpu_custom_call.1} parent=1 // pred_fallthru
      _
    // Predicated region
    $region26: #{tpu_custom_call.1} parent=1 // pred_check
      _
    $region27: #{tpu_custom_call.1} parent=1 // pred_check_branch
      %47 = sbr.rel (0) target = $region29
    $region28: #{tpu_custom_call.1} parent=1 // pred_region
      _
    $region29: #{tpu_custom_call.1} parent=1 // pred_fallthru
      _
    // Predicated region
    $region30: #{tpu_custom_call.1} parent=1 // pred_check
      _
    $region31: #{tpu_custom_call.1} parent=1 // pred_check_branch
      %49 = sbr.rel (0) target = $region33
    $region32: #{tpu_custom_call.1} parent=1 // pred_region
      _
    $region33: #{tpu_custom_call.1} parent=1 // pred_fallthru
      _
    // Predicated region
    $region34: #{tpu_custom_call.1} parent=1 // pred_check
      _
    $region35: #{tpu_custom_call.1} parent=1 // pred_check_branch
      %51 = sbr.rel (0) target = $region37
    $region36: #{tpu_custom_call.1} parent=1 // pred_region
      _
    $region37: #{tpu_custom_call.1} parent=1 // pred_fallthru
      _
    // Predicated region
    $region38: #{tpu_custom_call.1} parent=1 // pred_check
      _
    $region39: #{tpu_custom_call.1} parent=1 // pred_check_branch
      %53 = sbr.rel (0) target = $region41
    $region40: #{tpu_custom_call.1} parent=1 // pred_region
      _
    $region41: #{tpu_custom_call.1} parent=1 // pred_fallthru
      _
    // Predicated region
    $region42: #{tpu_custom_call.1} parent=1 // pred_check
      _
    $region43: #{tpu_custom_call.1} parent=1 // pred_check_branch
      %55 = sbr.rel (0) target = $region45
    $region44: #{tpu_custom_call.1} parent=1 // pred_region
      _
    $region45: #{tpu_custom_call.1} parent=1 // pred_fallthru
      _
    // Predicated region
    $region46: #{tpu_custom_call.1} parent=1 // pred_check
      _
    $region47: #{tpu_custom_call.1} parent=1 // pred_check_branch
      %57 = sbr.rel (0) target = $region49
    $region48: #{tpu_custom_call.1} parent=1 // pred_region
      %s59 = ssub.s32 14336, 14336
      %60 = vsyncadd [#allocation6], %s59
      %s61 = sshll.u32 [#allocation5], 4
      %s62 = int_to_ptr.vmem [resolvable:$true] %s61
      %67 = dma.hbm_to_vmem [thread:$0]  %s11, 14336, %s62, [#allocation6], 448, 448, 28
    $region49: #{tpu_custom_call.1} parent=1 // pred_fallthru
      _
    // Predicated region
    $region50: #{tpu_custom_call.1} parent=1 // pred_check
      _
    $region51: #{tpu_custom_call.1} parent=1 // pred_check_branch
      %69 = sbr.rel (0) target = $region53
    $region52: #{tpu_custom_call.1} parent=1 // pred_region
      _
    $region53: #{tpu_custom_call.1} parent=1 // pred_fallthru
      _
    // Predicated region
    $region54: #{tpu_custom_call.1} parent=1 // pred_check
      _
    $region55: #{tpu_custom_call.1} parent=1 // pred_check_branch
      %71 = sbr.rel (0) target = $region57
    $region56: #{tpu_custom_call.1} parent=1 // pred_region
      %72 = dma.done [#allocation3], 16384
    $region57: #{tpu_custom_call.1} parent=1 // pred_fallthru
      _
    // Predicated region
    $region58: #{tpu_custom_call.1} parent=1 // pred_check
      _
    $region59: #{tpu_custom_call.1} parent=1 // pred_check_branch
      %74 = sbr.rel (0) target = $region61
    $region60: #{tpu_custom_call.1} parent=1 // pred_region
      %75 = dma.done [#allocation6], 14336
    $region61: #{tpu_custom_call.1} parent=1 // pred_fallthru
      _
    %v77 = vld [vmem:[%s0] sm:$0xff]
    %v78 = vld [vmem:[%s0 + $0x8] sm:$0xff]
    %v79 = vld [vmem:[%s0 + $0x10] sm:$0xff]
    %v80 = vld [vmem:[%s0 + $0x18] sm:$0xff]
    %v82 = vrot.slane %v80, 4
    %v84 = vunpack.c.l.bf16 %v82
    %v85 = vld [vmem:[#allocation2] sm:$0xff]
    %v86 = vld [vmem:[#allocation2 + $0x8] sm:$0xff]
    %v87 = vld [vmem:[#allocation2 + $0x10] sm:$0xff]
    %v88 = vld [vmem:[#allocation2 + $0x18] sm:$0xff]
    %v89 = vld [vmem:[#allocation2 + $0x20] sm:$0xff]
    %v90 = vld [vmem:[#allocation2 + $0x28] sm:$0xff]
    %v91 = vld [vmem:[#allocation2 + $0x30] sm:$0xff]
    %v92 = vld [vmem:[#allocation2 + $0x38] sm:$0xff]
    %v93 = vld [vmem:[#allocation2 + $0x40] sm:$0xff]
    %v94 = vld [vmem:[#allocation2 + $0x48] sm:$0xff]
    %v95 = vld [vmem:[#allocation2 + $0x50] sm:$0xff]
    %v96 = vld [vmem:[#allocation2 + $0x58] sm:$0xff]
    %v97 = vld [vmem:[#allocation2 + $0x60] sm:$0xff]
    %v98 = vld [vmem:[#allocation2 + $0x68] sm:$0xff]
    %v99 = vld [vmem:[#allocation2 + $0x70] sm:$0xff]
    %v100 = vld [vmem:[#allocation2 + $0x78] sm:$0xff]
    %v101 = vld [vmem:[#allocation2 + $0x80] sm:$0xff]
    %v102 = vld [vmem:[#allocation2 + $0x88] sm:$0xff]
    %v103 = vld [vmem:[#allocation2 + $0x90] sm:$0xff]
    %v104 = vld [vmem:[#allocation2 + $0x98] sm:$0xff]
    %v105 = vld [vmem:[#allocation2 + $0xa0] sm:$0xff]
    %v106 = vld [vmem:[#allocation2 + $0xa8] sm:$0xff]
    %v107 = vld [vmem:[#allocation2 + $0xb0] sm:$0xff]
    %v108 = vld [vmem:[#allocation2 + $0xb8] sm:$0xff]
    %v109 = vld [vmem:[#allocation2 + $0xc0] sm:$0xff]
    %v110 = vld [vmem:[#allocation2 + $0xc8] sm:$0xff]
    %v111 = vld [vmem:[#allocation2 + $0xd0] sm:$0xff]
    %v112 = vld [vmem:[#allocation2 + $0xd8] sm:$0xff]
    %v113 = vld [vmem:[#allocation2 + $0xe0] sm:$0xff]
    %v114 = vld [vmem:[#allocation2 + $0xe8] sm:$0xff]
    %v115 = vld [vmem:[#allocation2 + $0xf0] sm:$0xff]
    %v116 = vld [vmem:[#allocation2 + $0xf8] sm:$0xff]
    %v117 = vld [vmem:[#allocation2 + $0x100] sm:$0xff]
    %v118 = vld [vmem:[#allocation2 + $0x108] sm:$0xff]
    %v119 = vld [vmem:[#allocation2 + $0x110] sm:$0xff]
    %v120 = vld [vmem:[#allocation2 + $0x118] sm:$0xff]
    %v121 = vld [vmem:[#allocation2 + $0x120] sm:$0xff]
    %v122 = vld [vmem:[#allocation2 + $0x128] sm:$0xff]
    %v123 = vld [vmem:[#allocation2 + $0x130] sm:$0xff]
    %v124 = vld [vmem:[#allocation2 + $0x138] sm:$0xff]
    %v125 = vld [vmem:[#allocation2 + $0x140] sm:$0xff]
    %v126 = vld [vmem:[#allocation2 + $0x148] sm:$0xff]
    %v127 = vld [vmem:[#allocation2 + $0x150] sm:$0xff]
    %v128 = vld [vmem:[#allocation2 + $0x158] sm:$0xff]
    %v129 = vld [vmem:[#allocation2 + $0x160] sm:$0xff]
    %v130 = vld [vmem:[#allocation2 + $0x168] sm:$0xff]
    %v131 = vld [vmem:[#allocation2 + $0x170] sm:$0xff]
    %v132 = vld [vmem:[#allocation2 + $0x178] sm:$0xff]
    %v133 = vld [vmem:[#allocation2 + $0x180] sm:$0xff]
    %v134 = vld [vmem:[#allocation2 + $0x188] sm:$0xff]
    %v135 = vld [vmem:[#allocation2 + $0x190] sm:$0xff]
    %v136 = vld [vmem:[#allocation2 + $0x198] sm:$0xff]
    %v137 = vld [vmem:[#allocation2 + $0x1a0] sm:$0xff]
    %v138 = vld [vmem:[#allocation2 + $0x1a8] sm:$0xff]
    %v139 = vld [vmem:[#allocation2 + $0x1b0] sm:$0xff]
    %v140 = vld [vmem:[#allocation2 + $0x1b8] sm:$0xff]
    %v141 = vld [vmem:[#allocation2 + $0x1c0] sm:$0xff]
    %v142 = vld [vmem:[#allocation2 + $0x1c8] sm:$0xff]
    %v143 = vld [vmem:[#allocation2 + $0x1d0] sm:$0xff]
    %v144 = vld [vmem:[#allocation2 + $0x1d8] sm:$0xff]
    %v145 = vld [vmem:[#allocation2 + $0x1e0] sm:$0xff]
    %v146 = vld [vmem:[#allocation2 + $0x1e8] sm:$0xff]
    %v147 = vld [vmem:[#allocation2 + $0x1f0] sm:$0xff]
    %v148 = vld [vmem:[#allocation2 + $0x1f8] sm:$0xff]
    %v149 = vld [vmem:[#allocation2 + $0x200] sm:$0xff]
    %v150 = vld [vmem:[#allocation2 + $0x208] sm:$0xff]
    %v151 = vld [vmem:[#allocation2 + $0x210] sm:$0xff]
    %v152 = vld [vmem:[#allocation2 + $0x218] sm:$0xff]
    %v153 = vld [vmem:[#allocation2 + $0x220] sm:$0xff]
    %v154 = vld [vmem:[#allocation2 + $0x228] sm:$0xff]
    %v155 = vld [vmem:[#allocation2 + $0x230] sm:$0xff]
    %v156 = vld [vmem:[#allocation2 + $0x238] sm:$0xff]
    %v157 = vld [vmem:[#allocation2 + $0x240] sm:$0xff]
    %v158 = vld [vmem:[#allocation2 + $0x248] sm:$0xff]
    %v159 = vld [vmem:[#allocation2 + $0x250] sm:$0xff]
    %v160 = vld [vmem:[#allocation2 + $0x258] sm:$0xff]
    %v161 = vld [vmem:[#allocation2 + $0x260] sm:$0xff]
    %v162 = vld [vmem:[#allocation2 + $0x268] sm:$0xff]
    %v163 = vld [vmem:[#allocation2 + $0x270] sm:$0xff]
    %v164 = vld [vmem:[#allocation2 + $0x278] sm:$0xff]
    %v165 = vld [vmem:[#allocation2 + $0x280] sm:$0xff]
    %v166 = vld [vmem:[#allocation2 + $0x288] sm:$0xff]
    %v167 = vld [vmem:[#allocation2 + $0x290] sm:$0xff]
    %v168 = vld [vmem:[#allocation2 + $0x298] sm:$0xff]
    %v169 = vld [vmem:[#allocation2 + $0x2a0] sm:$0xff]
    %v170 = vld [vmem:[#allocation2 + $0x2a8] sm:$0xff]
    %v171 = vld [vmem:[#allocation2 + $0x2b0] sm:$0xff]
    %v172 = vld [vmem:[#allocation2 + $0x2b8] sm:$0xff]
    %v173 = vld [vmem:[#allocation2 + $0x2c0] sm:$0xff]
    %v174 = vld [vmem:[#allocation2 + $0x2c8] sm:$0xff]
    %v175 = vld [vmem:[#allocation2 + $0x2d0] sm:$0xff]
    %v176 = vld [vmem:[#allocation2 + $0x2d8] sm:$0xff]
    %v177 = vld [vmem:[#allocation2 + $0x2e0] sm:$0xff]
    %v178 = vld [vmem:[#allocation2 + $0x2e8] sm:$0xff]
    %v179 = vld [vmem:[#allocation2 + $0x2f0] sm:$0xff]
    %v180 = vld [vmem:[#allocation2 + $0x2f8] sm:$0xff]
    %v181 = vld [vmem:[#allocation2 + $0x300] sm:$0xff]
    %v182 = vld [vmem:[#allocation2 + $0x308] sm:$0xff]
    %v183 = vld [vmem:[#allocation2 + $0x310] sm:$0xff]
    %v184 = vld [vmem:[#allocation2 + $0x318] sm:$0xff]
    %v185 = vld [vmem:[#allocation2 + $0x320] sm:$0xff]
    %v186 = vld [vmem:[#allocation2 + $0x328] sm:$0xff]
    %v187 = vld [vmem:[#allocation2 + $0x330] sm:$0xff]
    %v188 = vld [vmem:[#allocation2 + $0x338] sm:$0xff]
    %v189 = vld [vmem:[#allocation2 + $0x340] sm:$0xff]
    %v190 = vld [vmem:[#allocation2 + $0x348] sm:$0xff]
    %v191 = vld [vmem:[#allocation2 + $0x350] sm:$0xff]
    %v192 = vld [vmem:[#allocation2 + $0x358] sm:$0xff]
    %v193 = vld [vmem:[#allocation2 + $0x360] sm:$0xff]
    %v194 = vld [vmem:[#allocation2 + $0x368] sm:$0xff]
    %v195 = vld [vmem:[#allocation2 + $0x370] sm:$0xff]
    %v196 = vld [vmem:[#allocation2 + $0x378] sm:$0xff]
    %v197 = vld [vmem:[#allocation2 + $0x380] sm:$0xff]
    %v198 = vld [vmem:[#allocation2 + $0x388] sm:$0xff]
    %v199 = vld [vmem:[#allocation2 + $0x390] sm:$0xff]
    %v200 = vld [vmem:[#allocation2 + $0x398] sm:$0xff]
    %v201 = vld [vmem:[#allocation2 + $0x3a0] sm:$0xff]
    %v202 = vld [vmem:[#allocation2 + $0x3a8] sm:$0xff]
    %v203 = vld [vmem:[#allocation2 + $0x3b0] sm:$0xff]
    %v204 = vld [vmem:[#allocation2 + $0x3b8] sm:$0xff]
    %v205 = vld [vmem:[#allocation2 + $0x3c0] sm:$0xff]
    %v206 = vld [vmem:[#allocation2 + $0x3c8] sm:$0xff]
    %v207 = vld [vmem:[#allocation2 + $0x3d0] sm:$0xff]
    %v208 = vld [vmem:[#allocation2 + $0x3d8] sm:$0xff]
    %v209 = vld [vmem:[#allocation2 + $0x3e0] sm:$0xff]
    %v210 = vld [vmem:[#allocation2 + $0x3e8] sm:$0xff]
    %v211 = vld [vmem:[#allocation2 + $0x3f0] sm:$0xff]
    %v212 = vld [vmem:[#allocation2 + $0x3f8] sm:$0xff]
    %v213 = vld [vmem:[%s2] sm:$0x3]
    %v215 = vlaneseq
    %v216 = vshrl.u32 %v215, 7
    %v217 = vsub.s32 0, %v216
    %v218 = vrot.slane %v213, %v217
    %v219 = vlaneseq
    %v220 = vshrl.u32 %v219, 7
    %v221 = vsub.s32 1, %v220
    %v222 = vrot.slane %v213, %v221
    %v228 = vunpack.c.l.b16 %v77
    %v229 = vunpack.c.h.b16 %v77
    %v230 = vunpack.c.l.b16 %v78
    %v231 = vunpack.c.h.b16 %v78
    %v232 = vunpack.c.l.b16 %v79
    %v233 = vunpack.c.h.b16 %v79
    %v234 = vunpack.c.l.b16 %v80
    %v235 = vunpack.c.h.b16 %v80
    %v236 = vpack.c.b16 %v228, %v228
    %v237 = vpack.c.b16 %v229, %v229
    %v238 = vpack.c.b16 %v230, %v230
    %v239 = vpack.c.b16 %v231, %v231
    %v240 = vpack.c.b16 %v232, %v232
    %v241 = vpack.c.b16 %v233, %v233
    %v242 = vpack.c.b16 %v234, %v234
    %v243 = vpack.c.b16 %v235, %v235
    %v380 = vunpack.c.l.b16 %v85
    %v381 = vunpack.c.h.b16 %v85
    %v382 = vunpack.c.l.b16 %v86
    %v383 = vunpack.c.h.b16 %v86
    %v384 = vunpack.c.l.b16 %v87
    %v385 = vunpack.c.h.b16 %v87
    %v386 = vunpack.c.l.b16 %v88
    %v387 = vunpack.c.h.b16 %v88
    %v388 = vunpack.c.l.b16 %v89
    %v389 = vunpack.c.h.b16 %v89
    %v390 = vunpack.c.l.b16 %v90
    %v391 = vunpack.c.h.b16 %v90
    %v392 = vunpack.c.l.b16 %v91
    %v393 = vunpack.c.h.b16 %v91
    %v394 = vunpack.c.l.b16 %v92
    %v395 = vunpack.c.h.b16 %v92
    %v396 = vunpack.c.l.b16 %v93
    %v397 = vunpack.c.h.b16 %v93
    %v398 = vunpack.c.l.b16 %v94
    %v399 = vunpack.c.h.b16 %v94
    %v400 = vunpack.c.l.b16 %v95
    %v401 = vunpack.c.h.b16 %v95
    %v402 = vunpack.c.l.b16 %v96
    %v403 = vunpack.c.h.b16 %v96
    %v404 = vunpack.c.l.b16 %v97
    %v405 = vunpack.c.h.b16 %v97
    %v406 = vunpack.c.l.b16 %v98
    %v407 = vunpack.c.h.b16 %v98
    %v408 = vunpack.c.l.b16 %v99
    %v409 = vunpack.c.h.b16 %v99
    %v410 = vunpack.c.l.b16 %v100
    %v411 = vunpack.c.h.b16 %v100
    %v412 = vunpack.c.l.b16 %v101
    %v413 = vunpack.c.h.b16 %v101
    %v414 = vunpack.c.l.b16 %v102
    %v415 = vunpack.c.h.b16 %v102
    %v416 = vunpack.c.l.b16 %v103
    %v417 = vunpack.c.h.b16 %v103
    %v418 = vunpack.c.l.b16 %v104
    %v419 = vunpack.c.h.b16 %v104
    %v420 = vunpack.c.l.b16 %v105
    %v421 = vunpack.c.h.b16 %v105
    %v422 = vunpack.c.l.b16 %v106
    %v423 = vunpack.c.h.b16 %v106
    %v424 = vunpack.c.l.b16 %v107
    %v425 = vunpack.c.h.b16 %v107
    %v426 = vunpack.c.l.b16 %v108
    %v427 = vunpack.c.h.b16 %v108
    %v428 = vunpack.c.l.b16 %v109
    %v429 = vunpack.c.h.b16 %v109
    %v430 = vunpack.c.l.b16 %v110
    %v431 = vunpack.c.h.b16 %v110
    %v432 = vunpack.c.l.b16 %v111
    %v433 = vunpack.c.h.b16 %v111
    %v434 = vunpack.c.l.b16 %v112
    %v435 = vunpack.c.h.b16 %v112
    %v436 = vunpack.c.l.b16 %v113
    %v437 = vunpack.c.h.b16 %v113
    %v438 = vunpack.c.l.b16 %v114
    %v439 = vunpack.c.h.b16 %v114
    %v440 = vunpack.c.l.b16 %v115
    %v441 = vunpack.c.h.b16 %v115
    %v442 = vunpack.c.l.b16 %v116
    %v443 = vunpack.c.h.b16 %v116
    %v444 = vunpack.c.l.b16 %v117
    %v445 = vunpack.c.h.b16 %v117
    %v446 = vunpack.c.l.b16 %v118
    %v447 = vunpack.c.h.b16 %v118
    %v448 = vunpack.c.l.b16 %v119
    %v449 = vunpack.c.h.b16 %v119
    %v450 = vunpack.c.l.b16 %v120
    %v451 = vunpack.c.h.b16 %v120
    %v452 = vunpack.c.l.b16 %v121
    %v453 = vunpack.c.h.b16 %v121
    %v454 = vunpack.c.l.b16 %v122
    %v455 = vunpack.c.h.b16 %v122
    %v456 = vunpack.c.l.b16 %v123
    %v457 = vunpack.c.h.b16 %v123
    %v458 = vunpack.c.l.b16 %v124
    %v459 = vunpack.c.h.b16 %v124
    %v460 = vunpack.c.l.b16 %v125
    %v461 = vunpack.c.h.b16 %v125
    %v462 = vunpack.c.l.b16 %v126
    %v463 = vunpack.c.h.b16 %v126
    %v464 = vunpack.c.l.b16 %v127
    %v465 = vunpack.c.h.b16 %v127
    %v466 = vunpack.c.l.b16 %v128
    %v467 = vunpack.c.h.b16 %v128
    %v468 = vunpack.c.l.b16 %v129
    %v469 = vunpack.c.h.b16 %v129
    %v470 = vunpack.c.l.b16 %v130
    %v471 = vunpack.c.h.b16 %v130
    %v472 = vunpack.c.l.b16 %v131
    %v473 = vunpack.c.h.b16 %v131
    %v474 = vunpack.c.l.b16 %v132
    %v475 = vunpack.c.h.b16 %v132
    %v476 = vunpack.c.l.b16 %v133
    %v477 = vunpack.c.h.b16 %v133
    %v478 = vunpack.c.l.b16 %v134
    %v479 = vunpack.c.h.b16 %v134
    %v480 = vunpack.c.l.b16 %v135
    %v481 = vunpack.c.h.b16 %v135
    %v482 = vunpack.c.l.b16 %v136
    %v483 = vunpack.c.h.b16 %v136
    %v484 = vunpack.c.l.b16 %v137
    %v485 = vunpack.c.h.b16 %v137
    %v486 = vunpack.c.l.b16 %v138
    %v487 = vunpack.c.h.b16 %v138
    %v488 = vunpack.c.l.b16 %v139
    %v489 = vunpack.c.h.b16 %v139
    %v490 = vunpack.c.l.b16 %v140
    %v491 = vunpack.c.h.b16 %v140
    %v492 = vunpack.c.l.b16 %v141
    %v493 = vunpack.c.h.b16 %v141
    %v494 = vunpack.c.l.b16 %v142
    %v495 = vunpack.c.h.b16 %v142
    %v496 = vunpack.c.l.b16 %v143
    %v497 = vunpack.c.h.b16 %v143
    %v498 = vunpack.c.l.b16 %v144
    %v499 = vunpack.c.h.b16 %v144
    %v500 = vunpack.c.l.b16 %v145
    %v501 = vunpack.c.h.b16 %v145
    %v502 = vunpack.c.l.b16 %v146
    %v503 = vunpack.c.h.b16 %v146
    %v504 = vunpack.c.l.b16 %v147
    %v505 = vunpack.c.h.b16 %v147
    %v506 = vunpack.c.l.b16 %v148
    %v507 = vunpack.c.h.b16 %v148
    %v508 = vunpack.c.l.b16 %v149
    %v509 = vunpack.c.h.b16 %v149
    %v510 = vunpack.c.l.b16 %v150
    %v511 = vunpack.c.h.b16 %v150
    %v512 = vunpack.c.l.b16 %v151
    %v513 = vunpack.c.h.b16 %v151
    %v514 = vunpack.c.l.b16 %v152
    %v515 = vunpack.c.h.b16 %v152
    %v516 = vunpack.c.l.b16 %v153
    %v517 = vunpack.c.h.b16 %v153
    %v518 = vunpack.c.l.b16 %v154
    %v519 = vunpack.c.h.b16 %v154
    %v520 = vunpack.c.l.b16 %v155
    %v521 = vunpack.c.h.b16 %v155
    %v522 = vunpack.c.l.b16 %v156
    %v523 = vunpack.c.h.b16 %v156
    %v524 = vunpack.c.l.b16 %v157
    %v525 = vunpack.c.h.b16 %v157
    %v526 = vunpack.c.l.b16 %v158
    %v527 = vunpack.c.h.b16 %v158
    %v528 = vunpack.c.l.b16 %v159
    %v529 = vunpack.c.h.b16 %v159
    %v530 = vunpack.c.l.b16 %v160
    %v531 = vunpack.c.h.b16 %v160
    %v532 = vunpack.c.l.b16 %v161
    %v533 = vunpack.c.h.b16 %v161
    %v534 = vunpack.c.l.b16 %v162
    %v535 = vunpack.c.h.b16 %v162
    %v536 = vunpack.c.l.b16 %v163
    %v537 = vunpack.c.h.b16 %v163
    %v538 = vunpack.c.l.b16 %v164
    %v539 = vunpack.c.h.b16 %v164
    %v540 = vunpack.c.l.b16 %v165
    %v541 = vunpack.c.h.b16 %v165
    %v542 = vunpack.c.l.b16 %v166
    %v543 = vunpack.c.h.b16 %v166
    %v544 = vunpack.c.l.b16 %v167
    %v545 = vunpack.c.h.b16 %v167
    %v546 = vunpack.c.l.b16 %v168
    %v547 = vunpack.c.h.b16 %v168
    %v548 = vunpack.c.l.b16 %v169
    %v549 = vunpack.c.h.b16 %v169
    %v550 = vunpack.c.l.b16 %v170
    %v551 = vunpack.c.h.b16 %v170
    %v552 = vunpack.c.l.b16 %v171
    %v553 = vunpack.c.h.b16 %v171
    %v554 = vunpack.c.l.b16 %v172
    %v555 = vunpack.c.h.b16 %v172
    %v556 = vunpack.c.l.b16 %v173
    %v557 = vunpack.c.h.b16 %v173
    %v558 = vunpack.c.l.b16 %v174
    %v559 = vunpack.c.h.b16 %v174
    %v560 = vunpack.c.l.b16 %v175
    %v561 = vunpack.c.h.b16 %v175
    %v562 = vunpack.c.l.b16 %v176
    %v563 = vunpack.c.h.b16 %v176
    %v564 = vunpack.c.l.b16 %v177
    %v565 = vunpack.c.h.b16 %v177
    %v566 = vunpack.c.l.b16 %v178
    %v567 = vunpack.c.h.b16 %v178
    %v568 = vunpack.c.l.b16 %v179
    %v569 = vunpack.c.h.b16 %v179
    %v570 = vunpack.c.l.b16 %v180
    %v571 = vunpack.c.h.b16 %v180
    %v572 = vunpack.c.l.b16 %v181
    %v573 = vunpack.c.h.b16 %v181
    %v574 = vunpack.c.l.b16 %v182
    %v575 = vunpack.c.h.b16 %v182
    %v576 = vunpack.c.l.b16 %v183
    %v577 = vunpack.c.h.b16 %v183
    %v578 = vunpack.c.l.b16 %v184
    %v579 = vunpack.c.h.b16 %v184
    %v580 = vunpack.c.l.b16 %v185
    %v581 = vunpack.c.h.b16 %v185
    %v582 = vunpack.c.l.b16 %v186
    %v583 = vunpack.c.h.b16 %v186
    %v584 = vunpack.c.l.b16 %v187
    %v585 = vunpack.c.h.b16 %v187
    %v586 = vunpack.c.l.b16 %v188
    %v587 = vunpack.c.h.b16 %v188
    %v588 = vunpack.c.l.b16 %v189
    %v589 = vunpack.c.h.b16 %v189
    %v590 = vunpack.c.l.b16 %v190
    %v591 = vunpack.c.h.b16 %v190
    %v592 = vunpack.c.l.b16 %v191
    %v593 = vunpack.c.h.b16 %v191
    %v594 = vunpack.c.l.b16 %v192
    %v595 = vunpack.c.h.b16 %v192
    %v596 = vunpack.c.l.b16 %v193
    %v597 = vunpack.c.h.b16 %v193
    %v598 = vunpack.c.l.b16 %v194
    %v599 = vunpack.c.h.b16 %v194
    %v600 = vunpack.c.l.b16 %v195
    %v601 = vunpack.c.h.b16 %v195
    %v602 = vunpack.c.l.b16 %v196
    %v603 = vunpack.c.h.b16 %v196
    %v604 = vunpack.c.l.b16 %v197
    %v605 = vunpack.c.h.b16 %v197
    %v606 = vunpack.c.l.b16 %v198
    %v607 = vunpack.c.h.b16 %v198
    %v608 = vunpack.c.l.b16 %v199
    %v609 = vunpack.c.h.b16 %v199
    %v610 = vunpack.c.l.b16 %v200
    %v611 = vunpack.c.h.b16 %v200
    %v612 = vunpack.c.l.b16 %v201
    %v613 = vunpack.c.h.b16 %v201
    %v614 = vunpack.c.l.b16 %v202
    %v615 = vunpack.c.h.b16 %v202
    %v616 = vunpack.c.l.b16 %v203
    %v617 = vunpack.c.h.b16 %v203
    %v618 = vunpack.c.l.b16 %v204
    %v619 = vunpack.c.h.b16 %v204
    %v620 = vunpack.c.l.b16 %v205
    %v621 = vunpack.c.h.b16 %v205
    %v622 = vunpack.c.l.b16 %v206
    %v623 = vunpack.c.h.b16 %v206
    %v624 = vunpack.c.l.b16 %v207
    %v625 = vunpack.c.h.b16 %v207
    %v626 = vunpack.c.l.b16 %v208
    %v627 = vunpack.c.h.b16 %v208
    %v628 = vunpack.c.l.b16 %v209
    %v629 = vunpack.c.h.b16 %v209
    %v630 = vunpack.c.l.b16 %v210
    %v631 = vunpack.c.h.b16 %v210
    %v632 = vunpack.c.l.b16 %v211
    %v633 = vunpack.c.h.b16 %v211
    %v634 = vunpack.c.l.b16 %v212
    %v635 = vunpack.c.h.b16 %v212
    %v636 = vpack.c.b16 %v382, %v380
    %v637 = vpack.c.b16 %v383, %v381
    %v638 = vpack.c.b16 %v386, %v384
    %v639 = vpack.c.b16 %v387, %v385
    %v640 = vpack.c.b16 %v390, %v388
    %v641 = vpack.c.b16 %v391, %v389
    %v642 = vpack.c.b16 %v394, %v392
    %v643 = vpack.c.b16 %v395, %v393
    %v644 = vpack.c.b16 %v398, %v396
    %v645 = vpack.c.b16 %v399, %v397
    %v646 = vpack.c.b16 %v402, %v400
    %v647 = vpack.c.b16 %v403, %v401
    %v648 = vpack.c.b16 %v406, %v404
    %v649 = vpack.c.b16 %v407, %v405
    %v650 = vpack.c.b16 %v410, %v408
    %v651 = vpack.c.b16 %v411, %v409
    %v652 = vpack.c.b16 %v414, %v412
    %v653 = vpack.c.b16 %v415, %v413
    %v654 = vpack.c.b16 %v418, %v416
    %v655 = vpack.c.b16 %v419, %v417
    %v656 = vpack.c.b16 %v422, %v420
    %v657 = vpack.c.b16 %v423, %v421
    %v658 = vpack.c.b16 %v426, %v424
    %v659 = vpack.c.b16 %v427, %v425
    %v660 = vpack.c.b16 %v430, %v428
    %v661 = vpack.c.b16 %v431, %v429
    %v662 = vpack.c.b16 %v434, %v432
    %v663 = vpack.c.b16 %v435, %v433
    %v664 = vpack.c.b16 %v438, %v436
    %v665 = vpack.c.b16 %v439, %v437
    %v666 = vpack.c.b16 %v442, %v440
    %v667 = vpack.c.b16 %v443, %v441
    %v668 = vpack.c.b16 %v446, %v444
    %v669 = vpack.c.b16 %v447, %v445
    %v670 = vpack.c.b16 %v450, %v448
    %v671 = vpack.c.b16 %v451, %v449
    %v672 = vpack.c.b16 %v454, %v452
    %v673 = vpack.c.b16 %v455, %v453
    %v674 = vpack.c.b16 %v458, %v456
    %v675 = vpack.c.b16 %v459, %v457
    %v676 = vpack.c.b16 %v462, %v460
    %v677 = vpack.c.b16 %v463, %v461
    %v678 = vpack.c.b16 %v466, %v464
    %v679 = vpack.c.b16 %v467, %v465
    %v680 = vpack.c.b16 %v470, %v468
    %v681 = vpack.c.b16 %v471, %v469
    %v682 = vpack.c.b16 %v474, %v472
    %v683 = vpack.c.b16 %v475, %v473
    %v684 = vpack.c.b16 %v478, %v476
    %v685 = vpack.c.b16 %v479, %v477
    %v686 = vpack.c.b16 %v482, %v480
    %v687 = vpack.c.b16 %v483, %v481
    %v688 = vpack.c.b16 %v486, %v484
    %v689 = vpack.c.b16 %v487, %v485
    %v690 = vpack.c.b16 %v490, %v488
    %v691 = vpack.c.b16 %v491, %v489
    %v692 = vpack.c.b16 %v494, %v492
    %v693 = vpack.c.b16 %v495, %v493
    %v694 = vpack.c.b16 %v498, %v496
    %v695 = vpack.c.b16 %v499, %v497
    %v696 = vpack.c.b16 %v502, %v500
    %v697 = vpack.c.b16 %v503, %v501
    %v698 = vpack.c.b16 %v506, %v504
    %v699 = vpack.c.b16 %v507, %v505
    %v700 = vpack.c.b16 %v510, %v508
    %v701 = vpack.c.b16 %v511, %v509
    %v702 = vpack.c.b16 %v514, %v512
    %v703 = vpack.c.b16 %v515, %v513
    %v704 = vpack.c.b16 %v518, %v516
    %v705 = vpack.c.b16 %v519, %v517
    %v706 = vpack.c.b16 %v522, %v520
    %v707 = vpack.c.b16 %v523, %v521
    %v708 = vpack.c.b16 %v526, %v524
    %v709 = vpack.c.b16 %v527, %v525
    %v710 = vpack.c.b16 %v530, %v528
    %v711 = vpack.c.b16 %v531, %v529
    %v712 = vpack.c.b16 %v534, %v532
    %v713 = vpack.c.b16 %v535, %v533
    %v714 = vpack.c.b16 %v538, %v536
    %v715 = vpack.c.b16 %v539, %v537
    %v716 = vpack.c.b16 %v542, %v540
    %v717 = vpack.c.b16 %v543, %v541
    %v718 = vpack.c.b16 %v546, %v544
    %v719 = vpack.c.b16 %v547, %v545
    %v720 = vpack.c.b16 %v550, %v548
    %v721 = vpack.c.b16 %v551, %v549
    %v722 = vpack.c.b16 %v554, %v552
    %v723 = vpack.c.b16 %v555, %v553
    %v724 = vpack.c.b16 %v558, %v556
    %v725 = vpack.c.b16 %v559, %v557
    %v726 = vpack.c.b16 %v562, %v560
    %v727 = vpack.c.b16 %v563, %v561
    %v728 = vpack.c.b16 %v566, %v564
    %v729 = vpack.c.b16 %v567, %v565
    %v730 = vpack.c.b16 %v570, %v568
    %v731 = vpack.c.b16 %v571, %v569
    %v732 = vpack.c.b16 %v574, %v572
    %v733 = vpack.c.b16 %v575, %v573
    %v734 = vpack.c.b16 %v578, %v576
    %v735 = vpack.c.b16 %v579, %v577
    %v736 = vpack.c.b16 %v582, %v580
    %v737 = vpack.c.b16 %v583, %v581
    %v738 = vpack.c.b16 %v586, %v584
    %v739 = vpack.c.b16 %v587, %v585
    %v740 = vpack.c.b16 %v590, %v588
    %v741 = vpack.c.b16 %v591, %v589
    %v742 = vpack.c.b16 %v594, %v592
    %v743 = vpack.c.b16 %v595, %v593
    %v744 = vpack.c.b16 %v598, %v596
    %v745 = vpack.c.b16 %v599, %v597
    %v746 = vpack.c.b16 %v602, %v600
    %v747 = vpack.c.b16 %v603, %v601
    %v748 = vpack.c.b16 %v606, %v604
    %v749 = vpack.c.b16 %v607, %v605
    %v750 = vpack.c.b16 %v610, %v608
    %v751 = vpack.c.b16 %v611, %v609
    %v752 = vpack.c.b16 %v614, %v612
    %v753 = vpack.c.b16 %v615, %v613
    %v754 = vpack.c.b16 %v618, %v616
    %v755 = vpack.c.b16 %v619, %v617
    %v756 = vpack.c.b16 %v622, %v620
    %v757 = vpack.c.b16 %v623, %v621
    %v758 = vpack.c.b16 %v626, %v624
    %v759 = vpack.c.b16 %v627, %v625
    %v760 = vpack.c.b16 %v630, %v628
    %v761 = vpack.c.b16 %v631, %v629
    %v762 = vpack.c.b16 %v634, %v632
    %v763 = vpack.c.b16 %v635, %v633
    %892 = vmatprep.subr.bf16.mxu0 %v651
    %893 = vmatpush1.bf16.msra.mxu0 %v650
    %894 = vmatprep.subr.bf16.mxu0 %v649
    %895 = vmatpush1.bf16.msra.mxu0 %v648
    %896 = vmatprep.subr.bf16.mxu0 %v647
    %897 = vmatpush1.bf16.msra.mxu0 %v646
    %898 = vmatprep.subr.bf16.mxu0 %v645
    %899 = vmatpush1.bf16.msra.mxu0 %v644
    %900 = vmatprep.subr.bf16.mxu0 %v643
    %901 = vmatpush1.bf16.msra.mxu0 %v642
    %902 = vmatprep.subr.bf16.mxu0 %v641
    %903 = vmatpush1.bf16.msra.mxu0 %v640
    %904 = vmatprep.subr.bf16.mxu0 %v639
    %905 = vmatpush1.bf16.msra.mxu0 %v638
    %906 = vmatprep.subr.bf16.mxu0 %v637
    %907 = vmatpush1.bf16.msra.mxu0 %v636
    %908 = vmatprep.subr.bf16.mxu0 %v667
    %909 = vmatpush2.bf16.msra.mxu0 %v666
    %910 = vmatprep.subr.bf16.mxu0 %v665
    %911 = vmatpush2.bf16.msra.mxu0 %v664
    %912 = vmatprep.subr.bf16.mxu0 %v663
    %913 = vmatpush2.bf16.msra.mxu0 %v662
    %914 = vmatprep.subr.bf16.mxu0 %v661
    %915 = vmatpush2.bf16.msra.mxu0 %v660
    %916 = vmatprep.subr.bf16.mxu0 %v659
    %917 = vmatpush2.bf16.msra.mxu0 %v658
    %918 = vmatprep.subr.bf16.mxu0 %v657
    %919 = vmatpush2.bf16.msra.mxu0 %v656
    %920 = vmatprep.subr.bf16.mxu0 %v655
    %921 = vmatpush2.bf16.msra.mxu0 %v654
    %922 = vmatprep.subr.bf16.mxu0 %v653
    %923 = vmatpush2.bf16.msra.mxu0 %v652
    %924 = vmatprep.mubr.bf16.mxu0 %v237
    %925 = vmatmul.mubr.bf16.gmra.mxu0 %v236
    %v926 = vpop.f32.mrf.mxu0
    %v927 = vadd.f32 %v218, %v926
    %v928 = vpop.f32.mrf.mxu0
    %v929 = vadd.f32 %v222, %v928
    %v930 = vpop.f32.mrf.mxu0
    %v931 = vpop.f32.mrf.mxu0
    %932 = vdwg.mxu0
    %933 = vmatprep.subr.bf16.mxu0 %v683
    %934 = vmatpush1.bf16.msra.mxu0 %v682
    %935 = vmatprep.subr.bf16.mxu0 %v681
    %936 = vmatpush1.bf16.msra.mxu0 %v680
    %937 = vmatprep.subr.bf16.mxu0 %v679
    %938 = vmatpush1.bf16.msra.mxu0 %v678
    %939 = vmatprep.subr.bf16.mxu0 %v677
    %940 = vmatpush1.bf16.msra.mxu0 %v676
    %941 = vmatprep.subr.bf16.mxu0 %v675
    %942 = vmatpush1.bf16.msra.mxu0 %v674
    %943 = vmatprep.subr.bf16.mxu0 %v673
    %944 = vmatpush1.bf16.msra.mxu0 %v672
    %945 = vmatprep.subr.bf16.mxu0 %v671
    %946 = vmatpush1.bf16.msra.mxu0 %v670
    %947 = vmatprep.subr.bf16.mxu0 %v669
    %948 = vmatpush1.bf16.msra.mxu0 %v668
    %949 = vmatprep.subr.bf16.mxu0 %v699
    %950 = vmatpush2.bf16.msra.mxu0 %v698
    %951 = vmatprep.subr.bf16.mxu0 %v697
    %952 = vmatpush2.bf16.msra.mxu0 %v696
    %953 = vmatprep.subr.bf16.mxu0 %v695
    %954 = vmatpush2.bf16.msra.mxu0 %v694
    %955 = vmatprep.subr.bf16.mxu0 %v693
    %956 = vmatpush2.bf16.msra.mxu0 %v692
    %957 = vmatprep.subr.bf16.mxu0 %v691
    %958 = vmatpush2.bf16.msra.mxu0 %v690
    %959 = vmatprep.subr.bf16.mxu0 %v689
    %960 = vmatpush2.bf16.msra.mxu0 %v688
    %961 = vmatprep.subr.bf16.mxu0 %v687
    %962 = vmatpush2.bf16.msra.mxu0 %v686
    %963 = vmatprep.subr.bf16.mxu0 %v685
    %964 = vmatpush2.bf16.msra.mxu0 %v684
    %965 = vmatprep.mubr.bf16.mxu0 %v239
    %966 = vmatmul.mubr.bf16.gmra.mxu0 %v238
    %v967 = vpop.f32.mrf.mxu0
    %v968 = vadd.f32 %v927, %v967
    %v969 = vpop.f32.mrf.mxu0
    %v970 = vadd.f32 %v929, %v969
    %v971 = vpop.f32.mrf.mxu0
    %v972 = vpop.f32.mrf.mxu0
    %973 = vdwg.mxu0
    %974 = vmatprep.subr.bf16.mxu0 %v715
    %975 = vmatpush1.bf16.msra.mxu0 %v714
    %976 = vmatprep.subr.bf16.mxu0 %v713
    %977 = vmatpush1.bf16.msra.mxu0 %v712
    %978 = vmatprep.subr.bf16.mxu0 %v711
    %979 = vmatpush1.bf16.msra.mxu0 %v710
    %980 = vmatprep.subr.bf16.mxu0 %v709
    %981 = vmatpush1.bf16.msra.mxu0 %v708
    %982 = vmatprep.subr.bf16.mxu0 %v707
    %983 = vmatpush1.bf16.msra.mxu0 %v706
    %984 = vmatprep.subr.bf16.mxu0 %v705
    %985 = vmatpush1.bf16.msra.mxu0 %v704
    %986 = vmatprep.subr.bf16.mxu0 %v703
    %987 = vmatpush1.bf16.msra.mxu0 %v702
    %988 = vmatprep.subr.bf16.mxu0 %v701
    %989 = vmatpush1.bf16.msra.mxu0 %v700
    %990 = vmatprep.subr.bf16.mxu0 %v731
    %991 = vmatpush2.bf16.msra.mxu0 %v730
    %992 = vmatprep.subr.bf16.mxu0 %v729
    %993 = vmatpush2.bf16.msra.mxu0 %v728
    %994 = vmatprep.subr.bf16.mxu0 %v727
    %995 = vmatpush2.bf16.msra.mxu0 %v726
    %996 = vmatprep.subr.bf16.mxu0 %v725
    %997 = vmatpush2.bf16.msra.mxu0 %v724
    %998 = vmatprep.subr.bf16.mxu0 %v723
    %999 = vmatpush2.bf16.msra.mxu0 %v722
    %1000 = vmatprep.subr.bf16.mxu0 %v721
    %1001 = vmatpush2.bf16.msra.mxu0 %v720
    %1002 = vmatprep.subr.bf16.mxu0 %v719
    %1003 = vmatpush2.bf16.msra.mxu0 %v718
    %1004 = vmatprep.subr.bf16.mxu0 %v717
    %1005 = vmatpush2.bf16.msra.mxu0 %v716
    %1006 = vmatprep.mubr.bf16.mxu0 %v241
    %1007 = vmatmul.mubr.bf16.gmra.mxu0 %v240
    %v1008 = vpop.f32.mrf.mxu0
    %v1009 = vadd.f32 %v968, %v1008
    %v1010 = vpop.f32.mrf.mxu0
    %v1011 = vadd.f32 %v970, %v1010
    %v1012 = vpop.f32.mrf.mxu0
    %v1013 = vpop.f32.mrf.mxu0
    %1014 = vdwg.mxu0
    %1015 = vmatprep.subr.bf16.mxu0 %v747
    %1016 = vmatpush1.bf16.msra.mxu0 %v746
    %1017 = vmatprep.subr.bf16.mxu0 %v745
    %1018 = vmatpush1.bf16.msra.mxu0 %v744
    %1019 = vmatprep.subr.bf16.mxu0 %v743
    %1020 = vmatpush1.bf16.msra.mxu0 %v742
    %1021 = vmatprep.subr.bf16.mxu0 %v741
    %1022 = vmatpush1.bf16.msra.mxu0 %v740
    %1023 = vmatprep.subr.bf16.mxu0 %v739
    %1024 = vmatpush1.bf16.msra.mxu0 %v738
    %1025 = vmatprep.subr.bf16.mxu0 %v737
    %1026 = vmatpush1.bf16.msra.mxu0 %v736
    %1027 = vmatprep.subr.bf16.mxu0 %v735
    %1028 = vmatpush1.bf16.msra.mxu0 %v734
    %1029 = vmatprep.subr.bf16.mxu0 %v733
    %1030 = vmatpush1.bf16.msra.mxu0 %v732
    %1031 = vmatprep.subr.bf16.mxu0 %v763
    %1032 = vmatpush2.bf16.msra.mxu0 %v762
    %1033 = vmatprep.subr.bf16.mxu0 %v761
    %1034 = vmatpush2.bf16.msra.mxu0 %v760
    %1035 = vmatprep.subr.bf16.mxu0 %v759
    %1036 = vmatpush2.bf16.msra.mxu0 %v758
    %1037 = vmatprep.subr.bf16.mxu0 %v757
    %1038 = vmatpush2.bf16.msra.mxu0 %v756
    %1039 = vmatprep.subr.bf16.mxu0 %v755
    %1040 = vmatpush2.bf16.msra.mxu0 %v754
    %1041 = vmatprep.subr.bf16.mxu0 %v753
    %1042 = vmatpush2.bf16.msra.mxu0 %v752
    %1043 = vmatprep.subr.bf16.mxu0 %v751
    %1044 = vmatpush2.bf16.msra.mxu0 %v750
    %1045 = vmatprep.subr.bf16.mxu0 %v749
    %1046 = vmatpush2.bf16.msra.mxu0 %v748
    %1047 = vmatprep.mubr.bf16.mxu0 %v243
    %1048 = vmatmul.mubr.bf16.gmra.mxu0 %v242
    %v1049 = vpop.f32.mrf.mxu0
    %v1050 = vadd.f32 %v1009, %v1049
    %v1051 = vpop.f32.mrf.mxu0
    %v1052 = vadd.f32 %v1011, %v1051
    %v1053 = vpop.f32.mrf.mxu0
    %v1054 = vpop.f32.mrf.mxu0
    %1055 = vdwg.mxu0
    %v1056 = vmax.f32 %v1050, 0.0
    %v1057 = vmax.f32 %v1052, 0.0
    %v1058 = vpack.c.bf16 %v1056, %v1056
    %v1059 = vpack.c.bf16 %v1057, %v1057
    %v1060 = vld [vmem:[%s3] sm:$0xf]
    %v1061 = vld [vmem:[%s3 + $0x4] sm:$0xf]
    %v1062 = vld [vmem:[%s3 + $0x8] sm:$0xf]
    %v1063 = vld [vmem:[%s3 + $0xc] sm:$0xf]
    %v1064 = vld [vmem:[%s3 + $0x10] sm:$0xf]
    %v1065 = vld [vmem:[%s3 + $0x14] sm:$0xf]
    %v1066 = vld [vmem:[%s3 + $0x18] sm:$0xf]
    %v1067 = vld [vmem:[%s3 + $0x1c] sm:$0xf]
    %v1068 = vld [vmem:[%s3 + $0x20] sm:$0xf]
    %v1069 = vld [vmem:[%s3 + $0x24] sm:$0xf]
    %v1070 = vld [vmem:[%s3 + $0x28] sm:$0xf]
    %v1071 = vld [vmem:[%s3 + $0x2c] sm:$0xf]
    %v1072 = vld [vmem:[%s3 + $0x30] sm:$0xf]
    %v1073 = vld [vmem:[%s3 + $0x34] sm:$0xf]
    %v1074 = vld [vmem:[%s3 + $0x38] sm:$0xf]
    %v1075 = vld [vmem:[%s3 + $0x3c] sm:$0xf]
    %v1076 = vld [vmem:[%s3 + $0x40] sm:$0xf]
    %v1077 = vld [vmem:[%s3 + $0x44] sm:$0xf]
    %v1078 = vld [vmem:[%s3 + $0x48] sm:$0xf]
    %v1079 = vld [vmem:[%s3 + $0x4c] sm:$0xf]
    %v1080 = vld [vmem:[%s3 + $0x50] sm:$0xf]
    %v1081 = vld [vmem:[%s3 + $0x54] sm:$0xf]
    %v1082 = vld [vmem:[%s3 + $0x58] sm:$0xf]
    %v1083 = vld [vmem:[%s3 + $0x5c] sm:$0xf]
    %v1084 = vld [vmem:[%s3 + $0x60] sm:$0xf]
    %v1085 = vld [vmem:[%s3 + $0x64] sm:$0xf]
    %v1086 = vld [vmem:[%s3 + $0x68] sm:$0xf]
    %v1087 = vld [vmem:[%s3 + $0x6c] sm:$0xf]
    %v1088 = vld [vmem:[%s3 + $0x70] sm:$0xf]
    %v1089 = vld [vmem:[%s3 + $0x74] sm:$0xf]
    %v1090 = vld [vmem:[%s3 + $0x78] sm:$0xf]
    %v1091 = vld [vmem:[%s3 + $0x7c] sm:$0xf]
    %v1092 = vld [vmem:[%s4] sm:$0x1]
    %v1094 = vlaneseq
    %v1095 = vshrl.u32 %v1094, 7
    %v1096 = vsub.s32 0, %v1095
    %v1097 = vrot.slane %v1092, %v1096
    %v1131 = vunpack.c.l.b16 %v1060
    %v1132 = vunpack.c.l.b16 %v1061
    %v1133 = vunpack.c.l.b16 %v1062
    %v1134 = vunpack.c.l.b16 %v1063
    %v1135 = vunpack.c.l.b16 %v1064
    %v1136 = vunpack.c.l.b16 %v1065
    %v1137 = vunpack.c.l.b16 %v1066
    %v1138 = vunpack.c.l.b16 %v1067
    %v1139 = vunpack.c.l.b16 %v1068
    %v1140 = vunpack.c.l.b16 %v1069
    %v1141 = vunpack.c.l.b16 %v1070
    %v1142 = vunpack.c.l.b16 %v1071
    %v1143 = vunpack.c.l.b16 %v1072
    %v1144 = vunpack.c.l.b16 %v1073
    %v1145 = vunpack.c.l.b16 %v1074
    %v1146 = vunpack.c.l.b16 %v1075
    %v1147 = vunpack.c.l.b16 %v1076
    %v1148 = vunpack.c.l.b16 %v1077
    %v1149 = vunpack.c.l.b16 %v1078
    %v1150 = vunpack.c.l.b16 %v1079
    %v1151 = vunpack.c.l.b16 %v1080
    %v1152 = vunpack.c.l.b16 %v1081
    %v1153 = vunpack.c.l.b16 %v1082
    %v1154 = vunpack.c.l.b16 %v1083
    %v1155 = vunpack.c.l.b16 %v1084
    %v1156 = vunpack.c.l.b16 %v1085
    %v1157 = vunpack.c.l.b16 %v1086
    %v1158 = vunpack.c.l.b16 %v1087
    %v1159 = vunpack.c.l.b16 %v1088
    %v1160 = vunpack.c.l.b16 %v1089
    %v1161 = vunpack.c.l.b16 %v1090
    %v1162 = vunpack.c.l.b16 %v1091
    %v1163 = vpack.c.b16 %v1132, %v1131
    %v1164 = vpack.c.b16 %v1134, %v1133
    %v1165 = vpack.c.b16 %v1136, %v1135
    %v1166 = vpack.c.b16 %v1138, %v1137
    %v1167 = vpack.c.b16 %v1140, %v1139
    %v1168 = vpack.c.b16 %v1142, %v1141
    %v1169 = vpack.c.b16 %v1144, %v1143
    %v1170 = vpack.c.b16 %v1146, %v1145
    %v1171 = vpack.c.b16 %v1148, %v1147
    %v1172 = vpack.c.b16 %v1150, %v1149
    %v1173 = vpack.c.b16 %v1152, %v1151
    %v1174 = vpack.c.b16 %v1154, %v1153
    %v1175 = vpack.c.b16 %v1156, %v1155
    %v1176 = vpack.c.b16 %v1158, %v1157
    %v1177 = vpack.c.b16 %v1160, %v1159
    %v1178 = vpack.c.b16 %v1162, %v1161
    %1195 = vmatprep.subr.bf16.mxu0 0
    %1196 = vmatpush1.bf16.msra.mxu0 %v1170
    %1197 = vmatprep.subr.bf16.mxu0 0
    %1198 = vmatpush1.bf16.msra.mxu0 %v1169
    %1199 = vmatprep.subr.bf16.mxu0 0
    %1200 = vmatpush1.bf16.msra.mxu0 %v1168
    %1201 = vmatprep.subr.bf16.mxu0 0
    %1202 = vmatpush1.bf16.msra.mxu0 %v1167
    %1203 = vmatprep.subr.bf16.mxu0 0
    %1204 = vmatpush1.bf16.msra.mxu0 %v1166
    %1205 = vmatprep.subr.bf16.mxu0 0
    %1206 = vmatpush1.bf16.msra.mxu0 %v1165
    %1207 = vmatprep.subr.bf16.mxu0 0
    %1208 = vmatpush1.bf16.msra.mxu0 %v1164
    %1209 = vmatprep.subr.bf16.mxu0 0
    %1210 = vmatpush1.bf16.msra.mxu0 %v1163
    %1211 = vmatprep.subr.bf16.mxu0 0
    %1212 = vmatpush2.bf16.msra.mxu0 %v1178
    %1213 = vmatprep.subr.bf16.mxu0 0
    %1214 = vmatpush2.bf16.msra.mxu0 %v1177
    %1215 = vmatprep.subr.bf16.mxu0 0
    %1216 = vmatpush2.bf16.msra.mxu0 %v1176
    %1217 = vmatprep.subr.bf16.mxu0 0
    %1218 = vmatpush2.bf16.msra.mxu0 %v1175
    %1219 = vmatprep.subr.bf16.mxu0 0
    %1220 = vmatpush2.bf16.msra.mxu0 %v1174
    %1221 = vmatprep.subr.bf16.mxu0 0
    %1222 = vmatpush2.bf16.msra.mxu0 %v1173
    %1223 = vmatprep.subr.bf16.mxu0 0
    %1224 = vmatpush2.bf16.msra.mxu0 %v1172
    %1225 = vmatprep.subr.bf16.mxu0 0
    %1226 = vmatpush2.bf16.msra.mxu0 %v1171
    %1227 = vmatprep.mubr.bf16.mxu0 %v1059
    %1228 = vmatmul.mubr.bf16.gmra.mxu0 %v1058
    %v1229 = vpop.f32.mrf.mxu0
    %v1230 = vadd.f32 %v1097, %v1229
    %v1231 = vpop.f32.mrf.mxu0
    %v1232 = vpop.f32.mrf.mxu0
    %v1233 = vpop.f32.mrf.mxu0
    %1234 = vdwg.mxu0
    %v1235 = vmax.f32 %v1230, 0.0
    %v1236 = vpack.c.bf16 %v1235, %v1235
    %v1237 = vld [vmem:[%s5] sm:$0xf]
    %v1238 = vld [vmem:[%s5 + $0x4] sm:$0xf]
    %v1239 = vld [vmem:[%s5 + $0x8] sm:$0xf]
    %v1240 = vld [vmem:[%s5 + $0xc] sm:$0xf]
    %v1241 = vld [vmem:[%s5 + $0x10] sm:$0xf]
    %v1242 = vld [vmem:[%s5 + $0x14] sm:$0xf]
    %v1243 = vld [vmem:[%s5 + $0x18] sm:$0xf]
    %v1244 = vld [vmem:[%s5 + $0x1c] sm:$0xf]
    %v1245 = vld [vmem:[%s6] sm:$0x1]
    %v1247 = vlaneseq
    %v1248 = vshrl.u32 %v1247, 7
    %v1249 = vsub.s32 0, %v1248
    %v1250 = vrot.slane %v1245, %v1249
    %v1260 = vunpack.c.l.b16 %v1237
    %v1261 = vunpack.c.l.b16 %v1238
    %v1262 = vunpack.c.l.b16 %v1239
    %v1263 = vunpack.c.l.b16 %v1240
    %v1264 = vunpack.c.l.b16 %v1241
    %v1265 = vunpack.c.l.b16 %v1242
    %v1266 = vunpack.c.l.b16 %v1243
    %v1267 = vunpack.c.l.b16 %v1244
    %v1268 = vpack.c.b16 %v1261, %v1260
    %v1269 = vpack.c.b16 %v1263, %v1262
    %v1270 = vpack.c.b16 %v1265, %v1264
    %v1271 = vpack.c.b16 %v1267, %v1266
    %vm1276 = vcmask 523264
    %v1278 = vsel %vm1276, %v1236, 0
    %1280 = vmatprep.subr.bf16.mxu0 0
    %1281 = vmatpush1.bf16.msra.mxu0 0
    %1282 = vmatprep.subr.bf16.mxu0 0
    %1283 = vmatpush1.bf16.msra.mxu0 0
    %1284 = vmatprep.subr.bf16.mxu0 0
    %1285 = vmatpush1.bf16.msra.mxu0 0
    %1286 = vmatprep.subr.bf16.mxu0 0
    %1287 = vmatpush1.bf16.msra.mxu0 0
    %1288 = vmatprep.subr.bf16.mxu0 0
    %1289 = vmatpush1.bf16.msra.mxu0 %v1271
    %1290 = vmatprep.subr.bf16.mxu0 0
    %1291 = vmatpush1.bf16.msra.mxu0 %v1270
    %1292 = vmatprep.subr.bf16.mxu0 0
    %1293 = vmatpush1.bf16.msra.mxu0 %v1269
    %1294 = vmatprep.subr.bf16.mxu0 0
    %1295 = vmatpush1.bf16.msra.mxu0 %v1268
    %1296 = vmatprep.subr.bf16.mxu0 0
    %1297 = vmatpush2.bf16.msra.mxu0 0
    %1298 = vmatprep.subr.bf16.mxu0 0
    %1299 = vmatpush2.bf16.msra.mxu0 0
    %1300 = vmatprep.subr.bf16.mxu0 0
    %1301 = vmatpush2.bf16.msra.mxu0 0
    %1302 = vmatprep.subr.bf16.mxu0 0
    %1303 = vmatpush2.bf16.msra.mxu0 0
    %1304 = vmatprep.subr.bf16.mxu0 0
    %1305 = vmatpush2.bf16.msra.mxu0 0
    %1306 = vmatprep.subr.bf16.mxu0 0
    %1307 = vmatpush2.bf16.msra.mxu0 0
    %1308 = vmatprep.subr.bf16.mxu0 0
    %1309 = vmatpush2.bf16.msra.mxu0 0
    %1310 = vmatprep.subr.bf16.mxu0 0
    %1311 = vmatpush2.bf16.msra.mxu0 0
    %1312 = vmatprep.mubr.bf16.mxu0 0
    %1313 = vmatmul.mubr.bf16.gmra.mxu0 %v1278
    %v1314 = vpop.f32.mrf.mxu0
    %v1315 = vadd.f32 %v1250, %v1314
    %v1316 = vpop.f32.mrf.mxu0
    %v1317 = vpop.f32.mrf.mxu0
    %v1318 = vpop.f32.mrf.mxu0
    %1319 = vdwg.mxu0
    %v1320 = vmax.f32 %v1315, 0.0
    %v1321 = vmul.f32 %v1320, %v84
    %v1322 = vpack.c.bf16 %v1321, %v1321
    %v1323 = vld [vmem:[%s7] sm:$0xf]
    %v1324 = vld [vmem:[%s7 + $0x4] sm:$0xf]
    %v1325 = vld [vmem:[%s7 + $0x8] sm:$0xf]
    %v1326 = vld [vmem:[%s7 + $0xc] sm:$0xf]
    %v1327 = vld [vmem:[%s7 + $0x10] sm:$0xf]
    %v1328 = vld [vmem:[%s7 + $0x14] sm:$0xf]
    %v1329 = vld [vmem:[%s7 + $0x18] sm:$0xf]
    %v1330 = vld [vmem:[%s7 + $0x1c] sm:$0xf]
    %v1331 = vld [vmem:[%s7 + $0x20] sm:$0xf]
    %v1332 = vld [vmem:[%s7 + $0x24] sm:$0xf]
    %v1333 = vld [vmem:[%s7 + $0x28] sm:$0xf]
    %v1334 = vld [vmem:[%s7 + $0x2c] sm:$0xf]
    %v1335 = vld [vmem:[%s7 + $0x30] sm:$0xf]
    %v1336 = vld [vmem:[%s7 + $0x34] sm:$0xf]
    %v1337 = vld [vmem:[%s7 + $0x38] sm:$0xf]
    %v1338 = vld [vmem:[%s7 + $0x3c] sm:$0xf]
    %v1339 = vld [vmem:[%s8] sm:$0x1]
    %v1341 = vlaneseq
    %v1342 = vshrl.u32 %v1341, 7
    %v1343 = vsub.s32 0, %v1342
    %v1344 = vrot.slane %v1339, %v1343
    %v1362 = vunpack.c.l.b16 %v1323
    %v1363 = vunpack.c.l.b16 %v1324
    %v1364 = vunpack.c.l.b16 %v1325
    %v1365 = vunpack.c.l.b16 %v1326
    %v1366 = vunpack.c.l.b16 %v1327
    %v1367 = vunpack.c.l.b16 %v1328
    %v1368 = vunpack.c.l.b16 %v1329
    %v1369 = vunpack.c.l.b16 %v1330
    %v1370 = vunpack.c.l.b16 %v1331
    %v1371 = vunpack.c.l.b16 %v1332
    %v1372 = vunpack.c.l.b16 %v1333
    %v1373 = vunpack.c.l.b16 %v1334
    %v1374 = vunpack.c.l.b16 %v1335
    %v1375 = vunpack.c.l.b16 %v1336
    %v1376 = vunpack.c.l.b16 %v1337
    %v1377 = vunpack.c.l.b16 %v1338
    %v1378 = vpack.c.b16 %v1363, %v1362
    %v1379 = vpack.c.b16 %v1365, %v1364
    %v1380 = vpack.c.b16 %v1367, %v1366
    %v1381 = vpack.c.b16 %v1369, %v1368
    %v1382 = vpack.c.b16 %v1371, %v1370
    %v1383 = vpack.c.b16 %v1373, %v1372
    %v1384 = vpack.c.b16 %v1375, %v1374
    %v1385 = vpack.c.b16 %v1377, %v1376
    %1394 = vmatprep.subr.bf16.mxu0 0
    %1395 = vmatpush1.bf16.msra.mxu0 %v1385
    %1396 = vmatprep.subr.bf16.mxu0 0
    %1397 = vmatpush1.bf16.msra.mxu0 %v1384
    %1398 = vmatprep.subr.bf16.mxu0 0
    %1399 = vmatpush1.bf16.msra.mxu0 %v1383
    %1400 = vmatprep.subr.bf16.mxu0 0
    %1401 = vmatpush1.bf16.msra.mxu0 %v1382
    %1402 = vmatprep.subr.bf16.mxu0 0
    %1403 = vmatpush1.bf16.msra.mxu0 %v1381
    %1404 = vmatprep.subr.bf16.mxu0 0
    %1405 = vmatpush1.bf16.msra.mxu0 %v1380
    %1406 = vmatprep.subr.bf16.mxu0 0
    %1407 = vmatpush1.bf16.msra.mxu0 %v1379
    %1408 = vmatprep.subr.bf16.mxu0 0
    %1409 = vmatpush1.bf16.msra.mxu0 %v1378
    %1410 = vmatprep.subr.bf16.mxu0 0
    %1411 = vmatpush2.bf16.msra.mxu0 0
    %1412 = vmatprep.subr.bf16.mxu0 0
    %1413 = vmatpush2.bf16.msra.mxu0 0
    %1414 = vmatprep.subr.bf16.mxu0 0
    %1415 = vmatpush2.bf16.msra.mxu0 0
    %1416 = vmatprep.subr.bf16.mxu0 0
    %1417 = vmatpush2.bf16.msra.mxu0 0
    %1418 = vmatprep.subr.bf16.mxu0 0
    %1419 = vmatpush2.bf16.msra.mxu0 0
    %1420 = vmatprep.subr.bf16.mxu0 0
    %1421 = vmatpush2.bf16.msra.mxu0 0
    %1422 = vmatprep.subr.bf16.mxu0 0
    %1423 = vmatpush2.bf16.msra.mxu0 0
    %1424 = vmatprep.subr.bf16.mxu0 0
    %1425 = vmatpush2.bf16.msra.mxu0 0
    %1426 = vmatprep.mubr.bf16.mxu0 0
    %1427 = vmatmul.mubr.bf16.gmra.mxu0 %v1322
    %v1428 = vpop.f32.mrf.mxu0
    %v1429 = vadd.f32 %v1344, %v1428
    %v1430 = vpop.f32.mrf.mxu0
    %v1431 = vpop.f32.mrf.mxu0
    %v1432 = vpop.f32.mrf.mxu0
    %1433 = vdwg.mxu0
    %v1434 = vmax.f32 %v1429, 0.0
    %v1435 = vpack.c.bf16 %v1434, %v1434
    %v1436 = vld [vmem:[%s9] sm:$0xff]
    %v1437 = vld [vmem:[%s9 + $0x8] sm:$0xff]
    %v1438 = vld [vmem:[%s9 + $0x10] sm:$0xff]
    %v1439 = vld [vmem:[%s9 + $0x18] sm:$0xff]
    %v1440 = vld [vmem:[%s9 + $0x20] sm:$0xff]
    %v1441 = vld [vmem:[%s9 + $0x28] sm:$0xff]
    %v1442 = vld [vmem:[%s9 + $0x30] sm:$0xff]
    %v1443 = vld [vmem:[%s9 + $0x38] sm:$0xff]
    %v1444 = vld [vmem:[%s10] sm:$0x3]
    %v1446 = vlaneseq
    %v1447 = vshrl.u32 %v1446, 7
    %v1448 = vsub.s32 0, %v1447
    %v1449 = vrot.slane %v1444, %v1448
    %v1450 = vlaneseq
    %v1451 = vshrl.u32 %v1450, 7
    %v1452 = vsub.s32 1, %v1451
    %v1453 = vrot.slane %v1444, %v1452
    %v1464 = vunpack.c.l.b16 %v1436
    %v1465 = vunpack.c.h.b16 %v1436
    %v1466 = vunpack.c.l.b16 %v1437
    %v1467 = vunpack.c.h.b16 %v1437
    %v1468 = vunpack.c.l.b16 %v1438
    %v1469 = vunpack.c.h.b16 %v1438
    %v1470 = vunpack.c.l.b16 %v1439
    %v1471 = vunpack.c.h.b16 %v1439
    %v1472 = vunpack.c.l.b16 %v1440
    %v1473 = vunpack.c.h.b16 %v1440
    %v1474 = vunpack.c.l.b16 %v1441
    %v1475 = vunpack.c.h.b16 %v1441
    %v1476 = vunpack.c.l.b16 %v1442
    %v1477 = vunpack.c.h.b16 %v1442
    %v1478 = vunpack.c.l.b16 %v1443
    %v1479 = vunpack.c.h.b16 %v1443
    %v1480 = vpack.c.b16 %v1466, %v1464
    %v1481 = vpack.c.b16 %v1467, %v1465
    %v1482 = vpack.c.b16 %v1470, %v1468
    %v1483 = vpack.c.b16 %v1471, %v1469
    %v1484 = vpack.c.b16 %v1474, %v1472
    %v1485 = vpack.c.b16 %v1475, %v1473
    %v1486 = vpack.c.b16 %v1478, %v1476
    %v1487 = vpack.c.b16 %v1479, %v1477
    %v1497 = vsel %vm1276, %v1435, 0
    %1499 = vmatprep.subr.bf16.mxu0 0
    %1500 = vmatpush1.bf16.msra.mxu0 0
    %1501 = vmatprep.subr.bf16.mxu0 0
    %1502 = vmatpush1.bf16.msra.mxu0 0
    %1503 = vmatprep.subr.bf16.mxu0 0
    %1504 = vmatpush1.bf16.msra.mxu0 0
    %1505 = vmatprep.subr.bf16.mxu0 0
    %1506 = vmatpush1.bf16.msra.mxu0 0
    %1507 = vmatprep.subr.bf16.mxu0 %v1487
    %1508 = vmatpush1.bf16.msra.mxu0 %v1486
    %1509 = vmatprep.subr.bf16.mxu0 %v1485
    %1510 = vmatpush1.bf16.msra.mxu0 %v1484
    %1511 = vmatprep.subr.bf16.mxu0 %v1483
    %1512 = vmatpush1.bf16.msra.mxu0 %v1482
    %1513 = vmatprep.subr.bf16.mxu0 %v1481
    %1514 = vmatpush1.bf16.msra.mxu0 %v1480
    %1515 = vmatprep.subr.bf16.mxu0 0
    %1516 = vmatpush2.bf16.msra.mxu0 0
    %1517 = vmatprep.subr.bf16.mxu0 0
    %1518 = vmatpush2.bf16.msra.mxu0 0
    %1519 = vmatprep.subr.bf16.mxu0 0
    %1520 = vmatpush2.bf16.msra.mxu0 0
    %1521 = vmatprep.subr.bf16.mxu0 0
    %1522 = vmatpush2.bf16.msra.mxu0 0
    %1523 = vmatprep.subr.bf16.mxu0 0
    %1524 = vmatpush2.bf16.msra.mxu0 0
    %1525 = vmatprep.subr.bf16.mxu0 0
    %1526 = vmatpush2.bf16.msra.mxu0 0
    %1527 = vmatprep.subr.bf16.mxu0 0
    %1528 = vmatpush2.bf16.msra.mxu0 0
    %1529 = vmatprep.subr.bf16.mxu0 0
    %1530 = vmatpush2.bf16.msra.mxu0 0
    %1531 = vmatprep.mubr.bf16.mxu0 0
    %1532 = vmatmul.mubr.bf16.gmra.mxu0 %v1497
    %v1533 = vpop.f32.mrf.mxu0
    %v1534 = vadd.f32 %v1449, %v1533
    %v1535 = vpop.f32.mrf.mxu0
    %v1536 = vadd.f32 %v1453, %v1535
    %v1537 = vpop.f32.mrf.mxu0
    %v1538 = vpop.f32.mrf.mxu0
    %1539 = vdwg.mxu0
    %v1540 = vmax.f32 %v1534, 0.0
    %v1541 = vmax.f32 %v1536, 0.0
    %v1542 = vpack.c.bf16 %v1540, %v1540
    %v1543 = vpack.c.bf16 %v1541, %v1541
    %v1544 = vld [vmem:[#allocation5] sm:$0xff]
    %v1545 = vld [vmem:[#allocation5 + $0x8] sm:$0xff]
    %v1546 = vld [vmem:[#allocation5 + $0x10] sm:$0xff]
    %v1547 = vld [vmem:[#allocation5 + $0x18] sm:$0xf]
    %v1548 = vld [vmem:[#allocation5 + $0x1c] sm:$0xff]
    %v1549 = vld [vmem:[#allocation5 + $0x24] sm:$0xff]
    %v1550 = vld [vmem:[#allocation5 + $0x2c] sm:$0xff]
    %v1551 = vld [vmem:[#allocation5 + $0x34] sm:$0xf]
    %v1552 = vld [vmem:[#allocation5 + $0x38] sm:$0xff]
    %v1553 = vld [vmem:[#allocation5 + $0x40] sm:$0xff]
    %v1554 = vld [vmem:[#allocation5 + $0x48] sm:$0xff]
    %v1555 = vld [vmem:[#allocation5 + $0x50] sm:$0xf]
    %v1556 = vld [vmem:[#allocation5 + $0x54] sm:$0xff]
    %v1557 = vld [vmem:[#allocation5 + $0x5c] sm:$0xff]
    %v1558 = vld [vmem:[#allocation5 + $0x64] sm:$0xff]
    %v1559 = vld [vmem:[#allocation5 + $0x6c] sm:$0xf]
    %v1560 = vld [vmem:[#allocation5 + $0x70] sm:$0xff]
    %v1561 = vld [vmem:[#allocation5 + $0x78] sm:$0xff]
    %v1562 = vld [vmem:[#allocation5 + $0x80] sm:$0xff]
    %v1563 = vld [vmem:[#allocation5 + $0x88] sm:$0xf]
    %v1564 = vld [vmem:[#allocation5 + $0x8c] sm:$0xff]
    %v1565 = vld [vmem:[#allocation5 + $0x94] sm:$0xff]
    %v1566 = vld [vmem:[#allocation5 + $0x9c] sm:$0xff]
    %v1567 = vld [vmem:[#allocation5 + $0xa4] sm:$0xf]
    %v1568 = vld [vmem:[#allocation5 + $0xa8] sm:$0xff]
    %v1569 = vld [vmem:[#allocation5 + $0xb0] sm:$0xff]
    %v1570 = vld [vmem:[#allocation5 + $0xb8] sm:$0xff]
    %v1571 = vld [vmem:[#allocation5 + $0xc0] sm:$0xf]
    %v1572 = vld [vmem:[#allocation5 + $0xc4] sm:$0xff]
    %v1573 = vld [vmem:[#allocation5 + $0xcc] sm:$0xff]
    %v1574 = vld [vmem:[#allocation5 + $0xd4] sm:$0xff]
    %v1575 = vld [vmem:[#allocation5 + $0xdc] sm:$0xf]
    %v1576 = vld [vmem:[#allocation5 + $0xe0] sm:$0xff]
    %v1577 = vld [vmem:[#allocation5 + $0xe8] sm:$0xff]
    %v1578 = vld [vmem:[#allocation5 + $0xf0] sm:$0xff]
    %v1579 = vld [vmem:[#allocation5 + $0xf8] sm:$0xf]
    %v1580 = vld [vmem:[#allocation5 + $0xfc] sm:$0xff]
    %v1581 = vld [vmem:[#allocation5 + $0x104] sm:$0xff]
    %v1582 = vld [vmem:[#allocation5 + $0x10c] sm:$0xff]
    %v1583 = vld [vmem:[#allocation5 + $0x114] sm:$0xf]
    %v1584 = vld [vmem:[#allocation5 + $0x118] sm:$0xff]
    %v1585 = vld [vmem:[#allocation5 + $0x120] sm:$0xff]
    %v1586 = vld [vmem:[#allocation5 + $0x128] sm:$0xff]
    %v1587 = vld [vmem:[#allocation5 + $0x130] sm:$0xf]
    %v1588 = vld [vmem:[#allocation5 + $0x134] sm:$0xff]
    %v1589 = vld [vmem:[#allocation5 + $0x13c] sm:$0xff]
    %v1590 = vld [vmem:[#allocation5 + $0x144] sm:$0xff]
    %v1591 = vld [vmem:[#allocation5 + $0x14c] sm:$0xf]
    %v1592 = vld [vmem:[#allocation5 + $0x150] sm:$0xff]
    %v1593 = vld [vmem:[#allocation5 + $0x158] sm:$0xff]
    %v1594 = vld [vmem:[#allocation5 + $0x160] sm:$0xff]
    %v1595 = vld [vmem:[#allocation5 + $0x168] sm:$0xf]
    %v1596 = vld [vmem:[#allocation5 + $0x16c] sm:$0xff]
    %v1597 = vld [vmem:[#allocation5 + $0x174] sm:$0xff]
    %v1598 = vld [vmem:[#allocation5 + $0x17c] sm:$0xff]
    %v1599 = vld [vmem:[#allocation5 + $0x184] sm:$0xf]
    %v1600 = vld [vmem:[#allocation5 + $0x188] sm:$0xff]
    %v1601 = vld [vmem:[#allocation5 + $0x190] sm:$0xff]
    %v1602 = vld [vmem:[#allocation5 + $0x198] sm:$0xff]
    %v1603 = vld [vmem:[#allocation5 + $0x1a0] sm:$0xf]
    %v1604 = vld [vmem:[#allocation5 + $0x1a4] sm:$0xff]
    %v1605 = vld [vmem:[#allocation5 + $0x1ac] sm:$0xff]
    %v1606 = vld [vmem:[#allocation5 + $0x1b4] sm:$0xff]
    %v1607 = vld [vmem:[#allocation5 + $0x1bc] sm:$0xf]
    %v1608 = vld [vmem:[#allocation5 + $0x1c0] sm:$0xff]
    %v1609 = vld [vmem:[#allocation5 + $0x1c8] sm:$0xff]
    %v1610 = vld [vmem:[#allocation5 + $0x1d0] sm:$0xff]
    %v1611 = vld [vmem:[#allocation5 + $0x1d8] sm:$0xf]
    %v1612 = vld [vmem:[#allocation5 + $0x1dc] sm:$0xff]
    %v1613 = vld [vmem:[#allocation5 + $0x1e4] sm:$0xff]
    %v1614 = vld [vmem:[#allocation5 + $0x1ec] sm:$0xff]
    %v1615 = vld [vmem:[#allocation5 + $0x1f4] sm:$0xf]
    %v1616 = vld [vmem:[#allocation5 + $0x1f8] sm:$0xff]
    %v1617 = vld [vmem:[#allocation5 + $0x200] sm:$0xff]
    %v1618 = vld [vmem:[#allocation5 + $0x208] sm:$0xff]
    %v1619 = vld [vmem:[#allocation5 + $0x210] sm:$0xf]
    %v1620 = vld [vmem:[#allocation5 + $0x214] sm:$0xff]
    %v1621 = vld [vmem:[#allocation5 + $0x21c] sm:$0xff]
    %v1622 = vld [vmem:[#allocation5 + $0x224] sm:$0xff]
    %v1623 = vld [vmem:[#allocation5 + $0x22c] sm:$0xf]
    %v1624 = vld [vmem:[#allocation5 + $0x230] sm:$0xff]
    %v1625 = vld [vmem:[#allocation5 + $0x238] sm:$0xff]
    %v1626 = vld [vmem:[#allocation5 + $0x240] sm:$0xff]
    %v1627 = vld [vmem:[#allocation5 + $0x248] sm:$0xf]
    %v1628 = vld [vmem:[#allocation5 + $0x24c] sm:$0xff]
    %v1629 = vld [vmem:[#allocation5 + $0x254] sm:$0xff]
    %v1630 = vld [vmem:[#allocation5 + $0x25c] sm:$0xff]
    %v1631 = vld [vmem:[#allocation5 + $0x264] sm:$0xf]
    %v1632 = vld [vmem:[#allocation5 + $0x268] sm:$0xff]
    %v1633 = vld [vmem:[#allocation5 + $0x270] sm:$0xff]
    %v1634 = vld [vmem:[#allocation5 + $0x278] sm:$0xff]
    %v1635 = vld [vmem:[#allocation5 + $0x280] sm:$0xf]
    %v1636 = vld [vmem:[#allocation5 + $0x284] sm:$0xff]
    %v1637 = vld [vmem:[#allocation5 + $0x28c] sm:$0xff]
    %v1638 = vld [vmem:[#allocation5 + $0x294] sm:$0xff]
    %v1639 = vld [vmem:[#allocation5 + $0x29c] sm:$0xf]
    %v1640 = vld [vmem:[#allocation5 + $0x2a0] sm:$0xff]
    %v1641 = vld [vmem:[#allocation5 + $0x2a8] sm:$0xff]
    %v1642 = vld [vmem:[#allocation5 + $0x2b0] sm:$0xff]
    %v1643 = vld [vmem:[#allocation5 + $0x2b8] sm:$0xf]
    %v1644 = vld [vmem:[#allocation5 + $0x2bc] sm:$0xff]
    %v1645 = vld [vmem:[#allocation5 + $0x2c4] sm:$0xff]
    %v1646 = vld [vmem:[#allocation5 + $0x2cc] sm:$0xff]
    %v1647 = vld [vmem:[#allocation5 + $0x2d4] sm:$0xf]
    %v1648 = vld [vmem:[#allocation5 + $0x2d8] sm:$0xff]
    %v1649 = vld [vmem:[#allocation5 + $0x2e0] sm:$0xff]
    %v1650 = vld [vmem:[#allocation5 + $0x2e8] sm:$0xff]
    %v1651 = vld [vmem:[#allocation5 + $0x2f0] sm:$0xf]
    %v1652 = vld [vmem:[#allocation5 + $0x2f4] sm:$0xff]
    %v1653 = vld [vmem:[#allocation5 + $0x2fc] sm:$0xff]
    %v1654 = vld [vmem:[#allocation5 + $0x304] sm:$0xff]
    %v1655 = vld [vmem:[#allocation5 + $0x30c] sm:$0xf]
    %v1656 = vld [vmem:[#allocation5 + $0x310] sm:$0xff]
    %v1657 = vld [vmem:[#allocation5 + $0x318] sm:$0xff]
    %v1658 = vld [vmem:[#allocation5 + $0x320] sm:$0xff]
    %v1659 = vld [vmem:[#allocation5 + $0x328] sm:$0xf]
    %v1660 = vld [vmem:[#allocation5 + $0x32c] sm:$0xff]
    %v1661 = vld [vmem:[#allocation5 + $0x334] sm:$0xff]
    %v1662 = vld [vmem:[#allocation5 + $0x33c] sm:$0xff]
    %v1663 = vld [vmem:[#allocation5 + $0x344] sm:$0xf]
    %v1664 = vld [vmem:[#allocation5 + $0x348] sm:$0xff]
    %v1665 = vld [vmem:[#allocation5 + $0x350] sm:$0xff]
    %v1666 = vld [vmem:[#allocation5 + $0x358] sm:$0xff]
    %v1667 = vld [vmem:[#allocation5 + $0x360] sm:$0xf]
    %v1668 = vld [vmem:[#allocation5 + $0x364] sm:$0xff]
    %v1669 = vld [vmem:[#allocation5 + $0x36c] sm:$0xff]
    %v1670 = vld [vmem:[#allocation5 + $0x374] sm:$0xff]
    %v1671 = vld [vmem:[#allocation5 + $0x37c] sm:$0xf]
    %v1672 = vld [vmem:[%s12] sm:$0xff]
    %v1674 = vlaneseq
    %v1675 = vshrl.u32 %v1674, 7
    %v1676 = vsub.s32 0, %v1675
    %v1677 = vrot.slane %v1672, %v1676
    %v1678 = vlaneseq
    %v1679 = vshrl.u32 %v1678, 7
    %v1680 = vsub.s32 1, %v1679
    %v1681 = vrot.slane %v1672, %v1680
    %v1682 = vlaneseq
    %v1683 = vshrl.u32 %v1682, 7
    %v1684 = vsub.s32 2, %v1683
    %v1685 = vrot.slane %v1672, %v1684
    %v1686 = vlaneseq
    %v1687 = vshrl.u32 %v1686, 7
    %v1688 = vsub.s32 3, %v1687
    %v1689 = vrot.slane %v1672, %v1688
    %v1690 = vlaneseq
    %v1691 = vshrl.u32 %v1690, 7
    %v1692 = vsub.s32 4, %v1691
    %v1693 = vrot.slane %v1672, %v1692
    %v1694 = vlaneseq
    %v1695 = vshrl.u32 %v1694, 7
    %v1696 = vsub.s32 5, %v1695
    %v1697 = vrot.slane %v1672, %v1696
    %v1698 = vlaneseq
    %v1699 = vshrl.u32 %v1698, 7
    %v1700 = vsub.s32 6, %v1699
    %v1701 = vrot.slane %v1672, %v1700
    %v1837 = vunpack.c.l.b16 %v1544
    %v1838 = vunpack.c.h.b16 %v1544
    %v1839 = vunpack.c.l.b16 %v1545
    %v1840 = vunpack.c.h.b16 %v1545
    %v1841 = vunpack.c.l.b16 %v1546
    %v1842 = vunpack.c.h.b16 %v1546
    %v1843 = vunpack.c.l.b16 %v1547
    %v1844 = vunpack.c.l.b16 %v1548
    %v1845 = vunpack.c.h.b16 %v1548
    %v1846 = vunpack.c.l.b16 %v1549
    %v1847 = vunpack.c.h.b16 %v1549
    %v1848 = vunpack.c.l.b16 %v1550
    %v1849 = vunpack.c.h.b16 %v1550
    %v1850 = vunpack.c.l.b16 %v1551
    %v1851 = vunpack.c.l.b16 %v1552
    %v1852 = vunpack.c.h.b16 %v1552
    %v1853 = vunpack.c.l.b16 %v1553
    %v1854 = vunpack.c.h.b16 %v1553
    %v1855 = vunpack.c.l.b16 %v1554
    %v1856 = vunpack.c.h.b16 %v1554
    %v1857 = vunpack.c.l.b16 %v1555
    %v1858 = vunpack.c.l.b16 %v1556
    %v1859 = vunpack.c.h.b16 %v1556
    %v1860 = vunpack.c.l.b16 %v1557
    %v1861 = vunpack.c.h.b16 %v1557
    %v1862 = vunpack.c.l.b16 %v1558
    %v1863 = vunpack.c.h.b16 %v1558
    %v1864 = vunpack.c.l.b16 %v1559
    %v1865 = vunpack.c.l.b16 %v1560
    %v1866 = vunpack.c.h.b16 %v1560
    %v1867 = vunpack.c.l.b16 %v1561
    %v1868 = vunpack.c.h.b16 %v1561
    %v1869 = vunpack.c.l.b16 %v1562
    %v1870 = vunpack.c.h.b16 %v1562
    %v1871 = vunpack.c.l.b16 %v1563
    %v1872 = vunpack.c.l.b16 %v1564
    %v1873 = vunpack.c.h.b16 %v1564
    %v1874 = vunpack.c.l.b16 %v1565
    %v1875 = vunpack.c.h.b16 %v1565
    %v1876 = vunpack.c.l.b16 %v1566
    %v1877 = vunpack.c.h.b16 %v1566
    %v1878 = vunpack.c.l.b16 %v1567
    %v1879 = vunpack.c.l.b16 %v1568
    %v1880 = vunpack.c.h.b16 %v1568
    %v1881 = vunpack.c.l.b16 %v1569
    %v1882 = vunpack.c.h.b16 %v1569
    %v1883 = vunpack.c.l.b16 %v1570
    %v1884 = vunpack.c.h.b16 %v1570
    %v1885 = vunpack.c.l.b16 %v1571
    %v1886 = vunpack.c.l.b16 %v1572
    %v1887 = vunpack.c.h.b16 %v1572
    %v1888 = vunpack.c.l.b16 %v1573
    %v1889 = vunpack.c.h.b16 %v1573
    %v1890 = vunpack.c.l.b16 %v1574
    %v1891 = vunpack.c.h.b16 %v1574
    %v1892 = vunpack.c.l.b16 %v1575
    %v1893 = vunpack.c.l.b16 %v1576
    %v1894 = vunpack.c.h.b16 %v1576
    %v1895 = vunpack.c.l.b16 %v1577
    %v1896 = vunpack.c.h.b16 %v1577
    %v1897 = vunpack.c.l.b16 %v1578
    %v1898 = vunpack.c.h.b16 %v1578
    %v1899 = vunpack.c.l.b16 %v1579
    %v1900 = vunpack.c.l.b16 %v1580
    %v1901 = vunpack.c.h.b16 %v1580
    %v1902 = vunpack.c.l.b16 %v1581
    %v1903 = vunpack.c.h.b16 %v1581
    %v1904 = vunpack.c.l.b16 %v1582
    %v1905 = vunpack.c.h.b16 %v1582
    %v1906 = vunpack.c.l.b16 %v1583
    %v1907 = vunpack.c.l.b16 %v1584
    %v1908 = vunpack.c.h.b16 %v1584
    %v1909 = vunpack.c.l.b16 %v1585
    %v1910 = vunpack.c.h.b16 %v1585
    %v1911 = vunpack.c.l.b16 %v1586
    %v1912 = vunpack.c.h.b16 %v1586
    %v1913 = vunpack.c.l.b16 %v1587
    %v1914 = vunpack.c.l.b16 %v1588
    %v1915 = vunpack.c.h.b16 %v1588
    %v1916 = vunpack.c.l.b16 %v1589
    %v1917 = vunpack.c.h.b16 %v1589
    %v1918 = vunpack.c.l.b16 %v1590
    %v1919 = vunpack.c.h.b16 %v1590
    %v1920 = vunpack.c.l.b16 %v1591
    %v1921 = vunpack.c.l.b16 %v1592
    %v1922 = vunpack.c.h.b16 %v1592
    %v1923 = vunpack.c.l.b16 %v1593
    %v1924 = vunpack.c.h.b16 %v1593
    %v1925 = vunpack.c.l.b16 %v1594
    %v1926 = vunpack.c.h.b16 %v1594
    %v1927 = vunpack.c.l.b16 %v1595
    %v1928 = vunpack.c.l.b16 %v1596
    %v1929 = vunpack.c.h.b16 %v1596
    %v1930 = vunpack.c.l.b16 %v1597
    %v1931 = vunpack.c.h.b16 %v1597
    %v1932 = vunpack.c.l.b16 %v1598
    %v1933 = vunpack.c.h.b16 %v1598
    %v1934 = vunpack.c.l.b16 %v1599
    %v1935 = vunpack.c.l.b16 %v1600
    %v1936 = vunpack.c.h.b16 %v1600
    %v1937 = vunpack.c.l.b16 %v1601
    %v1938 = vunpack.c.h.b16 %v1601
    %v1939 = vunpack.c.l.b16 %v1602
    %v1940 = vunpack.c.h.b16 %v1602
    %v1941 = vunpack.c.l.b16 %v1603
    %v1942 = vunpack.c.l.b16 %v1604
    %v1943 = vunpack.c.h.b16 %v1604
    %v1944 = vunpack.c.l.b16 %v1605
    %v1945 = vunpack.c.h.b16 %v1605
    %v1946 = vunpack.c.l.b16 %v1606
    %v1947 = vunpack.c.h.b16 %v1606
    %v1948 = vunpack.c.l.b16 %v1607
    %v1949 = vunpack.c.l.b16 %v1608
    %v1950 = vunpack.c.h.b16 %v1608
    %v1951 = vunpack.c.l.b16 %v1609
    %v1952 = vunpack.c.h.b16 %v1609
    %v1953 = vunpack.c.l.b16 %v1610
    %v1954 = vunpack.c.h.b16 %v1610
    %v1955 = vunpack.c.l.b16 %v1611
    %v1956 = vunpack.c.l.b16 %v1612
    %v1957 = vunpack.c.h.b16 %v1612
    %v1958 = vunpack.c.l.b16 %v1613
    %v1959 = vunpack.c.h.b16 %v1613
    %v1960 = vunpack.c.l.b16 %v1614
    %v1961 = vunpack.c.h.b16 %v1614
    %v1962 = vunpack.c.l.b16 %v1615
    %v1963 = vunpack.c.l.b16 %v1616
    %v1964 = vunpack.c.h.b16 %v1616
    %v1965 = vunpack.c.l.b16 %v1617
    %v1966 = vunpack.c.h.b16 %v1617
    %v1967 = vunpack.c.l.b16 %v1618
    %v1968 = vunpack.c.h.b16 %v1618
    %v1969 = vunpack.c.l.b16 %v1619
    %v1970 = vunpack.c.l.b16 %v1620
    %v1971 = vunpack.c.h.b16 %v1620
    %v1972 = vunpack.c.l.b16 %v1621
    %v1973 = vunpack.c.h.b16 %v1621
    %v1974 = vunpack.c.l.b16 %v1622
    %v1975 = vunpack.c.h.b16 %v1622
    %v1976 = vunpack.c.l.b16 %v1623
    %v1977 = vunpack.c.l.b16 %v1624
    %v1978 = vunpack.c.h.b16 %v1624
    %v1979 = vunpack.c.l.b16 %v1625
    %v1980 = vunpack.c.h.b16 %v1625
    %v1981 = vunpack.c.l.b16 %v1626
    %v1982 = vunpack.c.h.b16 %v1626
    %v1983 = vunpack.c.l.b16 %v1627
    %v1984 = vunpack.c.l.b16 %v1628
    %v1985 = vunpack.c.h.b16 %v1628
    %v1986 = vunpack.c.l.b16 %v1629
    %v1987 = vunpack.c.h.b16 %v1629
    %v1988 = vunpack.c.l.b16 %v1630
    %v1989 = vunpack.c.h.b16 %v1630
    %v1990 = vunpack.c.l.b16 %v1631
    %v1991 = vunpack.c.l.b16 %v1632
    %v1992 = vunpack.c.h.b16 %v1632
    %v1993 = vunpack.c.l.b16 %v1633
    %v1994 = vunpack.c.h.b16 %v1633
    %v1995 = vunpack.c.l.b16 %v1634
    %v1996 = vunpack.c.h.b16 %v1634
    %v1997 = vunpack.c.l.b16 %v1635
    %v1998 = vunpack.c.l.b16 %v1636
    %v1999 = vunpack.c.h.b16 %v1636
    %v2000 = vunpack.c.l.b16 %v1637
    %v2001 = vunpack.c.h.b16 %v1637
    %v2002 = vunpack.c.l.b16 %v1638
    %v2003 = vunpack.c.h.b16 %v1638
    %v2004 = vunpack.c.l.b16 %v1639
    %v2005 = vunpack.c.l.b16 %v1640
    %v2006 = vunpack.c.h.b16 %v1640
    %v2007 = vunpack.c.l.b16 %v1641
    %v2008 = vunpack.c.h.b16 %v1641
    %v2009 = vunpack.c.l.b16 %v1642
    %v2010 = vunpack.c.h.b16 %v1642
    %v2011 = vunpack.c.l.b16 %v1643
    %v2012 = vunpack.c.l.b16 %v1644
    %v2013 = vunpack.c.h.b16 %v1644
    %v2014 = vunpack.c.l.b16 %v1645
    %v2015 = vunpack.c.h.b16 %v1645
    %v2016 = vunpack.c.l.b16 %v1646
    %v2017 = vunpack.c.h.b16 %v1646
    %v2018 = vunpack.c.l.b16 %v1647
    %v2019 = vunpack.c.l.b16 %v1648
    %v2020 = vunpack.c.h.b16 %v1648
    %v2021 = vunpack.c.l.b16 %v1649
    %v2022 = vunpack.c.h.b16 %v1649
    %v2023 = vunpack.c.l.b16 %v1650
    %v2024 = vunpack.c.h.b16 %v1650
    %v2025 = vunpack.c.l.b16 %v1651
    %v2026 = vunpack.c.l.b16 %v1652
    %v2027 = vunpack.c.h.b16 %v1652
    %v2028 = vunpack.c.l.b16 %v1653
    %v2029 = vunpack.c.h.b16 %v1653
    %v2030 = vunpack.c.l.b16 %v1654
    %v2031 = vunpack.c.h.b16 %v1654
    %v2032 = vunpack.c.l.b16 %v1655
    %v2033 = vunpack.c.l.b16 %v1656
    %v2034 = vunpack.c.h.b16 %v1656
    %v2035 = vunpack.c.l.b16 %v1657
    %v2036 = vunpack.c.h.b16 %v1657
    %v2037 = vunpack.c.l.b16 %v1658
    %v2038 = vunpack.c.h.b16 %v1658
    %v2039 = vunpack.c.l.b16 %v1659
    %v2040 = vunpack.c.l.b16 %v1660
    %v2041 = vunpack.c.h.b16 %v1660
    %v2042 = vunpack.c.l.b16 %v1661
    %v2043 = vunpack.c.h.b16 %v1661
    %v2044 = vunpack.c.l.b16 %v1662
    %v2045 = vunpack.c.h.b16 %v1662
    %v2046 = vunpack.c.l.b16 %v1663
    %v2047 = vunpack.c.l.b16 %v1664
    %v2048 = vunpack.c.h.b16 %v1664
    %v2049 = vunpack.c.l.b16 %v1665
    %v2050 = vunpack.c.h.b16 %v1665
    %v2051 = vunpack.c.l.b16 %v1666
    %v2052 = vunpack.c.h.b16 %v1666
    %v2053 = vunpack.c.l.b16 %v1667
    %v2054 = vunpack.c.l.b16 %v1668
    %v2055 = vunpack.c.h.b16 %v1668
    %v2056 = vunpack.c.l.b16 %v1669
    %v2057 = vunpack.c.h.b16 %v1669
    %v2058 = vunpack.c.l.b16 %v1670
    %v2059 = vunpack.c.h.b16 %v1670
    %v2060 = vunpack.c.l.b16 %v1671
    %v2061 = vpack.c.b16 %v1844, %v1837
    %v2062 = vpack.c.b16 %v1845, %v1838
    %v2063 = vpack.c.b16 %v1846, %v1839
    %v2064 = vpack.c.b16 %v1847, %v1840
    %v2065 = vpack.c.b16 %v1848, %v1841
    %v2066 = vpack.c.b16 %v1849, %v1842
    %v2067 = vpack.c.b16 %v1850, %v1843
    %v2068 = vpack.c.b16 %v1858, %v1851
    %v2069 = vpack.c.b16 %v1859, %v1852
    %v2070 = vpack.c.b16 %v1860, %v1853
    %v2071 = vpack.c.b16 %v1861, %v1854
    %v2072 = vpack.c.b16 %v1862, %v1855
    %v2073 = vpack.c.b16 %v1863, %v1856
    %v2074 = vpack.c.b16 %v1864, %v1857
    %v2075 = vpack.c.b16 %v1872, %v1865
    %v2076 = vpack.c.b16 %v1873, %v1866
    %v2077 = vpack.c.b16 %v1874, %v1867
    %v2078 = vpack.c.b16 %v1875, %v1868
    %v2079 = vpack.c.b16 %v1876, %v1869
    %v2080 = vpack.c.b16 %v1877, %v1870
    %v2081 = vpack.c.b16 %v1878, %v1871
    %v2082 = vpack.c.b16 %v1886, %v1879
    %v2083 = vpack.c.b16 %v1887, %v1880
    %v2084 = vpack.c.b16 %v1888, %v1881
    %v2085 = vpack.c.b16 %v1889, %v1882
    %v2086 = vpack.c.b16 %v1890, %v1883
    %v2087 = vpack.c.b16 %v1891, %v1884
    %v2088 = vpack.c.b16 %v1892, %v1885
    %v2089 = vpack.c.b16 %v1900, %v1893
    %v2090 = vpack.c.b16 %v1901, %v1894
    %v2091 = vpack.c.b16 %v1902, %v1895
    %v2092 = vpack.c.b16 %v1903, %v1896
    %v2093 = vpack.c.b16 %v1904, %v1897
    %v2094 = vpack.c.b16 %v1905, %v1898
    %v2095 = vpack.c.b16 %v1906, %v1899
    %v2096 = vpack.c.b16 %v1914, %v1907
    %v2097 = vpack.c.b16 %v1915, %v1908
    %v2098 = vpack.c.b16 %v1916, %v1909
    %v2099 = vpack.c.b16 %v1917, %v1910
    %v2100 = vpack.c.b16 %v1918, %v1911
    %v2101 = vpack.c.b16 %v1919, %v1912
    %v2102 = vpack.c.b16 %v1920, %v1913
    %v2103 = vpack.c.b16 %v1928, %v1921
    %v2104 = vpack.c.b16 %v1929, %v1922
    %v2105 = vpack.c.b16 %v1930, %v1923
    %v2106 = vpack.c.b16 %v1931, %v1924
    %v2107 = vpack.c.b16 %v1932, %v1925
    %v2108 = vpack.c.b16 %v1933, %v1926
    %v2109 = vpack.c.b16 %v1934, %v1927
    %v2110 = vpack.c.b16 %v1942, %v1935
    %v2111 = vpack.c.b16 %v1943, %v1936
    %v2112 = vpack.c.b16 %v1944, %v1937
    %v2113 = vpack.c.b16 %v1945, %v1938
    %v2114 = vpack.c.b16 %v1946, %v1939
    %v2115 = vpack.c.b16 %v1947, %v1940
    %v2116 = vpack.c.b16 %v1948, %v1941
    %v2117 = vpack.c.b16 %v1956, %v1949
    %v2118 = vpack.c.b16 %v1957, %v1950
    %v2119 = vpack.c.b16 %v1958, %v1951
    %v2120 = vpack.c.b16 %v1959, %v1952
    %v2121 = vpack.c.b16 %v1960, %v1953
    %v2122 = vpack.c.b16 %v1961, %v1954
    %v2123 = vpack.c.b16 %v1962, %v1955
    %v2124 = vpack.c.b16 %v1970, %v1963
    %v2125 = vpack.c.b16 %v1971, %v1964
    %v2126 = vpack.c.b16 %v1972, %v1965
    %v2127 = vpack.c.b16 %v1973, %v1966
    %v2128 = vpack.c.b16 %v1974, %v1967
    %v2129 = vpack.c.b16 %v1975, %v1968
    %v2130 = vpack.c.b16 %v1976, %v1969
    %v2131 = vpack.c.b16 %v1984, %v1977
    %v2132 = vpack.c.b16 %v1985, %v1978
    %v2133 = vpack.c.b16 %v1986, %v1979
    %v2134 = vpack.c.b16 %v1987, %v1980
    %v2135 = vpack.c.b16 %v1988, %v1981
    %v2136 = vpack.c.b16 %v1989, %v1982
    %v2137 = vpack.c.b16 %v1990, %v1983
    %v2138 = vpack.c.b16 %v1998, %v1991
    %v2139 = vpack.c.b16 %v1999, %v1992
    %v2140 = vpack.c.b16 %v2000, %v1993
    %v2141 = vpack.c.b16 %v2001, %v1994
    %v2142 = vpack.c.b16 %v2002, %v1995
    %v2143 = vpack.c.b16 %v2003, %v1996
    %v2144 = vpack.c.b16 %v2004, %v1997
    %v2145 = vpack.c.b16 %v2012, %v2005
    %v2146 = vpack.c.b16 %v2013, %v2006
    %v2147 = vpack.c.b16 %v2014, %v2007
    %v2148 = vpack.c.b16 %v2015, %v2008
    %v2149 = vpack.c.b16 %v2016, %v2009
    %v2150 = vpack.c.b16 %v2017, %v2010
    %v2151 = vpack.c.b16 %v2018, %v2011
    %v2152 = vpack.c.b16 %v2026, %v2019
    %v2153 = vpack.c.b16 %v2027, %v2020
    %v2154 = vpack.c.b16 %v2028, %v2021
    %v2155 = vpack.c.b16 %v2029, %v2022
    %v2156 = vpack.c.b16 %v2030, %v2023
    %v2157 = vpack.c.b16 %v2031, %v2024
    %v2158 = vpack.c.b16 %v2032, %v2025
    %v2159 = vpack.c.b16 %v2040, %v2033
    %v2160 = vpack.c.b16 %v2041, %v2034
    %v2161 = vpack.c.b16 %v2042, %v2035
    %v2162 = vpack.c.b16 %v2043, %v2036
    %v2163 = vpack.c.b16 %v2044, %v2037
    %v2164 = vpack.c.b16 %v2045, %v2038
    %v2165 = vpack.c.b16 %v2046, %v2039
    %v2166 = vpack.c.b16 %v2054, %v2047
    %v2167 = vpack.c.b16 %v2055, %v2048
    %v2168 = vpack.c.b16 %v2056, %v2049
    %v2169 = vpack.c.b16 %v2057, %v2050
    %v2170 = vpack.c.b16 %v2058, %v2051
    %v2171 = vpack.c.b16 %v2059, %v2052
    %v2172 = vpack.c.b16 %v2060, %v2053
    %2285 = vmatprep.subr.bf16.mxu0 %v2111
    %2286 = vmatpush1.bf16.msra.mxu0 %v2110
    %2287 = vmatprep.subr.bf16.mxu0 %v2104
    %2288 = vmatpush1.bf16.msra.mxu0 %v2103
    %2289 = vmatprep.subr.bf16.mxu0 %v2097
    %2290 = vmatpush1.bf16.msra.mxu0 %v2096
    %2291 = vmatprep.subr.bf16.mxu0 %v2090
    %2292 = vmatpush1.bf16.msra.mxu0 %v2089
    %2293 = vmatprep.subr.bf16.mxu0 %v2083
    %2294 = vmatpush1.bf16.msra.mxu0 %v2082
    %2295 = vmatprep.subr.bf16.mxu0 %v2076
    %2296 = vmatpush1.bf16.msra.mxu0 %v2075
    %2297 = vmatprep.subr.bf16.mxu0 %v2069
    %2298 = vmatpush1.bf16.msra.mxu0 %v2068
    %2299 = vmatprep.subr.bf16.mxu0 %v2062
    %2300 = vmatpush1.bf16.msra.mxu0 %v2061
    %2301 = vmatprep.subr.bf16.mxu0 %v2167
    %2302 = vmatpush2.bf16.msra.mxu0 %v2166
    %2303 = vmatprep.subr.bf16.mxu0 %v2160
    %2304 = vmatpush2.bf16.msra.mxu0 %v2159
    %2305 = vmatprep.subr.bf16.mxu0 %v2153
    %2306 = vmatpush2.bf16.msra.mxu0 %v2152
    %2307 = vmatprep.subr.bf16.mxu0 %v2146
    %2308 = vmatpush2.bf16.msra.mxu0 %v2145
    %2309 = vmatprep.subr.bf16.mxu0 %v2139
    %2310 = vmatpush2.bf16.msra.mxu0 %v2138
    %2311 = vmatprep.subr.bf16.mxu0 %v2132
    %2312 = vmatpush2.bf16.msra.mxu0 %v2131
    %2313 = vmatprep.subr.bf16.mxu0 %v2125
    %2314 = vmatpush2.bf16.msra.mxu0 %v2124
    %2315 = vmatprep.subr.bf16.mxu0 %v2118
    %2316 = vmatpush2.bf16.msra.mxu0 %v2117
    %2317 = vmatprep.mubr.bf16.mxu0 %v1543
    %2318 = vmatmul.mubr.bf16.gmra.mxu0 %v1542
    %v2319 = vpop.f32.mrf.mxu0
    %v2320 = vadd.f32 %v1677, %v2319
    %v2321 = vpop.f32.mrf.mxu0
    %v2322 = vadd.f32 %v1681, %v2321
    %v2323 = vpop.f32.mrf.mxu0
    %v2324 = vpop.f32.mrf.mxu0
    %2325 = vdwg.mxu0
    %2326 = vmatprep.subr.bf16.mxu0 %v2113
    %2327 = vmatpush1.bf16.msra.mxu0 %v2112
    %2328 = vmatprep.subr.bf16.mxu0 %v2106
    %2329 = vmatpush1.bf16.msra.mxu0 %v2105
    %2330 = vmatprep.subr.bf16.mxu0 %v2099
    %2331 = vmatpush1.bf16.msra.mxu0 %v2098
    %2332 = vmatprep.subr.bf16.mxu0 %v2092
    %2333 = vmatpush1.bf16.msra.mxu0 %v2091
    %2334 = vmatprep.subr.bf16.mxu0 %v2085
    %2335 = vmatpush1.bf16.msra.mxu0 %v2084
    %2336 = vmatprep.subr.bf16.mxu0 %v2078
    %2337 = vmatpush1.bf16.msra.mxu0 %v2077
    %2338 = vmatprep.subr.bf16.mxu0 %v2071
    %2339 = vmatpush1.bf16.msra.mxu0 %v2070
    %2340 = vmatprep.subr.bf16.mxu0 %v2064
    %2341 = vmatpush1.bf16.msra.mxu0 %v2063
    %2342 = vmatprep.subr.bf16.mxu0 %v2169
    %2343 = vmatpush2.bf16.msra.mxu0 %v2168
    %2344 = vmatprep.subr.bf16.mxu0 %v2162
    %2345 = vmatpush2.bf16.msra.mxu0 %v2161
    %2346 = vmatprep.subr.bf16.mxu0 %v2155
    %2347 = vmatpush2.bf16.msra.mxu0 %v2154
    %2348 = vmatprep.subr.bf16.mxu0 %v2148
    %2349 = vmatpush2.bf16.msra.mxu0 %v2147
    %2350 = vmatprep.subr.bf16.mxu0 %v2141
    %2351 = vmatpush2.bf16.msra.mxu0 %v2140
    %2352 = vmatprep.subr.bf16.mxu0 %v2134
    %2353 = vmatpush2.bf16.msra.mxu0 %v2133
    %2354 = vmatprep.subr.bf16.mxu0 %v2127
    %2355 = vmatpush2.bf16.msra.mxu0 %v2126
    %2356 = vmatprep.subr.bf16.mxu0 %v2120
    %2357 = vmatpush2.bf16.msra.mxu0 %v2119
    %2358 = vmatprep.mubr.bf16.mxu0 %v1543
    %2359 = vmatmul.mubr.bf16.gmra.mxu0 %v1542
    %v2360 = vpop.f32.mrf.mxu0
    %v2361 = vadd.f32 %v1685, %v2360
    %v2362 = vpop.f32.mrf.mxu0
    %v2363 = vadd.f32 %v1689, %v2362
    %v2364 = vpop.f32.mrf.mxu0
    %v2365 = vpop.f32.mrf.mxu0
    %2366 = vdwg.mxu0
    %2367 = vmatprep.subr.bf16.mxu0 %v2115
    %2368 = vmatpush1.bf16.msra.mxu0 %v2114
    %2369 = vmatprep.subr.bf16.mxu0 %v2108
    %2370 = vmatpush1.bf16.msra.mxu0 %v2107
    %2371 = vmatprep.subr.bf16.mxu0 %v2101
    %2372 = vmatpush1.bf16.msra.mxu0 %v2100
    %2373 = vmatprep.subr.bf16.mxu0 %v2094
    %2374 = vmatpush1.bf16.msra.mxu0 %v2093
    %2375 = vmatprep.subr.bf16.mxu0 %v2087
    %2376 = vmatpush1.bf16.msra.mxu0 %v2086
    %2377 = vmatprep.subr.bf16.mxu0 %v2080
    %2378 = vmatpush1.bf16.msra.mxu0 %v2079
    %2379 = vmatprep.subr.bf16.mxu0 %v2073
    %2380 = vmatpush1.bf16.msra.mxu0 %v2072
    %2381 = vmatprep.subr.bf16.mxu0 %v2066
    %2382 = vmatpush1.bf16.msra.mxu0 %v2065
    %2383 = vmatprep.subr.bf16.mxu0 %v2171
    %2384 = vmatpush2.bf16.msra.mxu0 %v2170
    %2385 = vmatprep.subr.bf16.mxu0 %v2164
    %2386 = vmatpush2.bf16.msra.mxu0 %v2163
    %2387 = vmatprep.subr.bf16.mxu0 %v2157
    %2388 = vmatpush2.bf16.msra.mxu0 %v2156
    %2389 = vmatprep.subr.bf16.mxu0 %v2150
    %2390 = vmatpush2.bf16.msra.mxu0 %v2149
    %2391 = vmatprep.subr.bf16.mxu0 %v2143
    %2392 = vmatpush2.bf16.msra.mxu0 %v2142
    %2393 = vmatprep.subr.bf16.mxu0 %v2136
    %2394 = vmatpush2.bf16.msra.mxu0 %v2135
    %2395 = vmatprep.subr.bf16.mxu0 %v2129
    %2396 = vmatpush2.bf16.msra.mxu0 %v2128
    %2397 = vmatprep.subr.bf16.mxu0 %v2122
    %2398 = vmatpush2.bf16.msra.mxu0 %v2121
    %2399 = vmatprep.mubr.bf16.mxu0 %v1543
    %2400 = vmatmul.mubr.bf16.gmra.mxu0 %v1542
    %v2401 = vpop.f32.mrf.mxu0
    %v2402 = vadd.f32 %v1693, %v2401
    %v2403 = vpop.f32.mrf.mxu0
    %v2404 = vadd.f32 %v1697, %v2403
    %v2405 = vpop.f32.mrf.mxu0
    %v2406 = vpop.f32.mrf.mxu0
    %2407 = vdwg.mxu0
    %2408 = vmatprep.subr.bf16.mxu0 0
    %2409 = vmatpush1.bf16.msra.mxu0 %v2116
    %2410 = vmatprep.subr.bf16.mxu0 0
    %2411 = vmatpush1.bf16.msra.mxu0 %v2109
    %2412 = vmatprep.subr.bf16.mxu0 0
    %2413 = vmatpush1.bf16.msra.mxu0 %v2102
    %2414 = vmatprep.subr.bf16.mxu0 0
    %2415 = vmatpush1.bf16.msra.mxu0 %v2095
    %2416 = vmatprep.subr.bf16.mxu0 0
    %2417 = vmatpush1.bf16.msra.mxu0 %v2088
    %2418 = vmatprep.subr.bf16.mxu0 0
    %2419 = vmatpush1.bf16.msra.mxu0 %v2081
    %2420 = vmatprep.subr.bf16.mxu0 0
    %2421 = vmatpush1.bf16.msra.mxu0 %v2074
    %2422 = vmatprep.subr.bf16.mxu0 0
    %2423 = vmatpush1.bf16.msra.mxu0 %v2067
    %2424 = vmatprep.subr.bf16.mxu0 0
    %2425 = vmatpush2.bf16.msra.mxu0 %v2172
    %2426 = vmatprep.subr.bf16.mxu0 0
    %2427 = vmatpush2.bf16.msra.mxu0 %v2165
    %2428 = vmatprep.subr.bf16.mxu0 0
    %2429 = vmatpush2.bf16.msra.mxu0 %v2158
    %2430 = vmatprep.subr.bf16.mxu0 0
    %2431 = vmatpush2.bf16.msra.mxu0 %v2151
    %2432 = vmatprep.subr.bf16.mxu0 0
    %2433 = vmatpush2.bf16.msra.mxu0 %v2144
    %2434 = vmatprep.subr.bf16.mxu0 0
    %2435 = vmatpush2.bf16.msra.mxu0 %v2137
    %2436 = vmatprep.subr.bf16.mxu0 0
    %2437 = vmatpush2.bf16.msra.mxu0 %v2130
    %2438 = vmatprep.subr.bf16.mxu0 0
    %2439 = vmatpush2.bf16.msra.mxu0 %v2123
    %2440 = vmatprep.mubr.bf16.mxu0 %v1543
    %2441 = vmatmul.mubr.bf16.gmra.mxu0 %v1542
    %v2442 = vpop.f32.mrf.mxu0
    %v2443 = vadd.f32 %v1701, %v2442
    %v2444 = vpop.f32.mrf.mxu0
    %v2445 = vpop.f32.mrf.mxu0
    %v2446 = vpop.f32.mrf.mxu0
    %2447 = vdwg.mxu0
    %v2448 = vxor.u32 %v2320, 2147483648
    %v2449 = vxor.u32 %v2322, 2147483648
    %v2450 = vxor.u32 %v2361, 2147483648
    %v2451 = vxor.u32 %v2363, 2147483648
    %v2452 = vxor.u32 %v2402, 2147483648
    %v2453 = vxor.u32 %v2404, 2147483648
    %v2454 = vxor.u32 %v2443, 2147483648
    %v2455 = vmul.f32 %v2448, 1.442695
    %v2456 = vpow.pop %v2455
    %v2457 = vmul.f32 %v2449, 1.442695
    %v2458 = vpow.pop %v2457
    %v2459 = vmul.f32 %v2450, 1.442695
    %v2460 = vpow.pop %v2459
    %v2461 = vmul.f32 %v2451, 1.442695
    %v2462 = vpow.pop %v2461
    %v2463 = vmul.f32 %v2452, 1.442695
    %v2464 = vpow.pop %v2463
    %v2465 = vmul.f32 %v2453, 1.442695
    %v2466 = vpow.pop %v2465
    %v2467 = vmul.f32 %v2454, 1.442695
    %v2468 = vpow.pop %v2467
    %v2469 = vadd.f32 %v2456, 1.0
    %v2470 = vadd.f32 %v2458, 1.0
    %v2471 = vadd.f32 %v2460, 1.0
    %v2472 = vadd.f32 %v2462, 1.0
    %v2473 = vadd.f32 %v2464, 1.0
    %v2474 = vadd.f32 %v2466, 1.0
    %v2475 = vadd.f32 %v2468, 1.0
    %v2476 = vrcp.pop %v2469
    %v2477 = vmul.f32 1.0, %v2476
    %v2478 = vrcp.pop %v2470
    %v2479 = vmul.f32 1.0, %v2478
    %v2480 = vrcp.pop %v2471
    %v2481 = vmul.f32 1.0, %v2480
    %v2482 = vrcp.pop %v2472
    %v2483 = vmul.f32 1.0, %v2482
    %v2484 = vrcp.pop %v2473
    %v2485 = vmul.f32 1.0, %v2484
    %v2486 = vrcp.pop %v2474
    %v2487 = vmul.f32 1.0, %v2486
    %v2488 = vrcp.pop %v2475
    %v2489 = vmul.f32 1.0, %v2488
    %v2490 = vpack.c.bf16 %v2477, %v2477
    %v2491 = vpack.c.bf16 %v2479, %v2479
    %v2492 = vpack.c.bf16 %v2481, %v2481
    %v2493 = vpack.c.bf16 %v2483, %v2483
    %v2494 = vpack.c.bf16 %v2485, %v2485
    %v2495 = vpack.c.bf16 %v2487, %v2487
    %v2496 = vpack.c.bf16 %v2489, %v2489
    %v2504 = vunpack.c.l.b16 %v2490
    %v2505 = vunpack.c.l.b16 %v2491
    %v2506 = vunpack.c.l.b16 %v2492
    %v2507 = vunpack.c.l.b16 %v2493
    %v2508 = vunpack.c.l.b16 %v2494
    %v2509 = vunpack.c.l.b16 %v2495
    %v2510 = vunpack.c.l.b16 %v2496
    %v2511 = vpack.c.b16 %v2505, %v2504
    %v2512 = vpack.c.b16 %v2507, %v2506
    %v2513 = vpack.c.b16 %v2509, %v2508
    %v2514 = vpack.c.b16 %v2510, %v2510
    %2519 = vst [vmem:[#allocation7] sm:$0xff] %v2511
    %2520 = vst [vmem:[#allocation7 + $0x8] sm:$0xff] %v2512
    %2521 = vst [vmem:[#allocation7 + $0x10] sm:$0xff] %v2513
    %2522 = vst [vmem:[#allocation7 + $0x18] sm:$0xf] %v2514
    %v2523 = vmul.f32 %v1320, %v1320
    %v2524 = vlaneseq
    %v2525 = vand.u32 %v2524, 127
    %vm2526 = vcmp.ge.s32.totalorder %v2525, 10
    %vm2527 = vcmp.lt.s32.totalorder %v2525, 20
    %vm2528 = vmand %vm2526, %vm2527
    %v2529 = vadd.f32 %v2523, 1e-08
    %v2530 = vlog2.pop %v2529
    %v2531 = vmul.f32 %v2530, 0.6931472
    %v2532 = vsub.f32 0.0, %v2531
    %v2533 = vsub.f32 %v2532, 1.0
    %v2534 = vsel %vm2528, %v2533, 0.0
    %v2535 = vadd.f32 %v2523, %v2534
    %2537 = vset.pattern.permute.xlu0 0
    %2538 = vperm.xlu0 %2537, %v84
    %v2539 = vpop.permute.xlu0 %2538
    %v2541 = vmul.f32 %v2535, %v2539
    %v2542 = vadd.f32 %v2541, 0.0
    %2543 = vst [vmem:[#allocation8] sm:$0xff] %v2542
    // Predicated region
    $region62: #{tpu_custom_call.1} parent=1 // pred_check
      _
    $region63: #{tpu_custom_call.1} parent=1 // pred_check_branch
      %2545 = sbr.rel (0) target = $region65
    $region64: #{tpu_custom_call.1} parent=1 // pred_region
      %s2547 = ssub.s32 448, 448
      %2548 = vsyncadd [#allocation4], %s2547
      %s2550 = sshll.u32 [#allocation7], 4
      %s2551 = int_to_ptr.vmem [resolvable:$true] %s2550
      %2553 = dma.vmem_to_hbm [thread:$0]  %s2551, 448, %s13, [#allocation4]
    $region65: #{tpu_custom_call.1} parent=1 // pred_fallthru
      _
    // Predicated region
    $region66: #{tpu_custom_call.1} parent=1 // pred_check
      _
    $region67: #{tpu_custom_call.1} parent=1 // pred_check_branch
      %2555 = sbr.rel (0) target = $region69
    $region68: #{tpu_custom_call.1} parent=1 // pred_region
      %s2557 = ssub.s32 128, 128
      %2558 = vsyncadd [#allocation9], %s2557
      %s2560 = sshll.u32 [#allocation8], 4
      %s2561 = int_to_ptr.vmem [resolvable:$true] %s2560
      %2563 = dma.vmem_to_hbm [thread:$0]  %s2561, 128, %s14, [#allocation9]
    $region69: #{tpu_custom_call.1} parent=1 // pred_fallthru
      _
    // Predicated region
    $region70: #{tpu_custom_call.1} parent=1 // pred_check
      _
    $region71: #{tpu_custom_call.1} parent=1 // pred_check_branch
      %2565 = sbr.rel (0) target = $region73
    $region72: #{tpu_custom_call.1} parent=1 // pred_region
      %2566 = dma.done [#allocation4], 448
    $region73: #{tpu_custom_call.1} parent=1 // pred_fallthru
      _
    // Predicated region
    $region74: #{tpu_custom_call.1} parent=1 // pred_check
      _
    $region75: #{tpu_custom_call.1} parent=1 // pred_check_branch
      %2568 = sbr.rel (0) target = $region77
    $region76: #{tpu_custom_call.1} parent=1 // pred_region
      %2569 = dma.done [#allocation9], 128
    $region77: #{tpu_custom_call.1} parent=1 // pred_fallthru
      _
    %2570 = vsyncpa [#allocation3], 1
    %2571 = vsyncpa [#allocation6], 1
    %2572 = vsyncpa [#allocation4], 1
    %2573 = vsyncpa [#allocation9], 1

</llo_original>
